<compile_context>
chip_gen: v7x
topology: tpu7x:2x2x1
jax: 0.10.0
libtpu: 0.0.40
codegen_flags: <defaults>
</compile_context>

<pallas_src>
import jax
import jax.numpy as jnp
from jax.experimental import pallas as pl
from jax.experimental.pallas import tpu as pltpu

LANE = 128
H1_PAD = 128   # logical 50  -> padded 128
H2_PAD = 128   # logical 10  -> padded 128


def _autoencoder_kernel(x_ref,
                        w1_ref, b1_ref,
                        w2_ref, b2_ref,
                        w3_ref, b3_ref,
                        w4_ref, b4_ref,
                        o_ref):
    # bf16 operands for the MXU; accumulate in f32; sigmoid in f32.
    x = x_ref[...].astype(jnp.bfloat16)                               # (bm, Q)

    # Hoist bias reads once per tile (f32, implicit broadcast in the adds).
    b1 = b1_ref[...]
    b2 = b2_ref[...]
    b3 = b3_ref[...]
    b4 = b4_ref[...]

    h = jnp.dot(x, w1_ref[...], preferred_element_type=jnp.float32) + b1
    h = jax.nn.sigmoid(h).astype(jnp.bfloat16)                        # (bm, 128)

    h = jnp.dot(h, w2_ref[...], preferred_element_type=jnp.float32) + b2
    h = jax.nn.sigmoid(h).astype(jnp.bfloat16)                        # (bm, 128)

    h = jnp.dot(h, w3_ref[...], preferred_element_type=jnp.float32) + b3
    h = jax.nn.sigmoid(h).astype(jnp.bfloat16)                        # (bm, 128)

    h = jnp.dot(h, w4_ref[...], preferred_element_type=jnp.float32) + b4
    o_ref[...] = jax.nn.sigmoid(h).astype(o_ref.dtype)                # (bm, Q)


def autoencoder_forward(x, padded_params, *, bm=256):
    """x: [batch, num_question] float32. padded_params: output of pad_and_cast_params."""
    w1, b1, w2, b2, w3, b3, w4, b4 = padded_params
    B, Q = x.shape

    # Tile only the batch axis; pad batch up to a multiple of bm.
    n_tiles = max(pl.cdiv(B, bm), 1)
    Bp = n_tiles * bm
    if Bp != B:
        x = jnp.pad(x, ((0, Bp - B), (0, 0)))

    # Weights/biases are tiny (< 200 KiB total) and use a constant block index,
    # so they are not re-fetched per grid step.
    full2d = lambda arr: pl.BlockSpec(arr.shape, lambda i: (0, 0))

    out = pl.pallas_call(
        _autoencoder_kernel,
        out_shape=jax.ShapeDtypeStruct((Bp, Q), x.dtype),
        grid=(n_tiles,),
        in_specs=[
            # If the DMA of the x tile ever shows exposed time, deepen the
            # pipeline here with pipeline_mode=pl.Buffered(3).
            pl.BlockSpec((bm, Q), lambda i: (i, 0)),
            full2d(w1), full2d(b1),
            full2d(w2), full2d(b2),
            full2d(w3), full2d(b3),
            full2d(w4), full2d(b4),
        ],
        out_specs=pl.BlockSpec((bm, Q), lambda i: (i, 0)),
        compiler_params=pltpu.CompilerParams(
            dimension_semantics=("parallel",),
        ),
    )(x, w1, b1, w2, b2, w3, b3, w4, b4)

    return out[:B]


def init_params(num_question, key):
    """Deterministic init matching nn.Linear shapes (stored transposed: [in, out]), f32."""
    dims = [(num_question, 50), (50, 10), (10, 50), (50, num_question)]
    params = []
    for (fan_in, fan_out) in dims:
        key, kw, kb = jax.random.split(key, 3)
        bound = 1.0 / jnp.sqrt(fan_in)
        w = jax.random.uniform(kw, (fan_in, fan_out), jnp.float32, -bound, bound)
        b = jax.random.uniform(kb, (1, fan_out), jnp.float32, -bound, bound)
        params.append((w, b))
    return params


def pad_and_cast_params(params, num_question):
    """Zero-pad hidden dims to 128 lanes; weights -> bf16, biases stay f32.

    Padded weight ROWS are zero so the 0.5s appearing in padded sigmoid lanes
    contribute nothing to the next layer; padded bias entries are zero.
    """
    (w1, b1), (w2, b2), (w3, b3), (w4, b4) = params
    Q = num_question

    def pad_w(w, in_pad, out_pad):
        out = jnp.zeros((in_pad, out_pad), jnp.float32)
        out = out.at[: w.shape[0], : w.shape[1]].set(w)
        return out.astype(jnp.bfloat16)

    def pad_b(b, out_pad):
        out = jnp.zeros((1, out_pad), jnp.float32)
        return out.at[:, : b.shape[1]].set(b)

    return (
        pad_w(w1, Q, H1_PAD), pad_b(b1, H1_PAD),
        pad_w(w2, H1_PAD, H2_PAD), pad_b(b2, H2_PAD),
        pad_w(w3, H2_PAD, H1_PAD), pad_b(b3, H1_PAD),
        pad_w(w4, H1_PAD, Q), pad_b(b4, Q),
    )


def reference_forward_matched(x, padded_params):
    """Pure-JAX reference doing the same bf16-operand / f32-accumulate math."""
    w1, b1, w2, b2, w3, b3, w4, b4 = padded_params
    h = x.astype(jnp.bfloat16)
    for (w, b) in ((w1, b1), (w2, b2), (w3, b3)):
        h = jax.nn.sigmoid(jnp.dot(h, w, preferred_element_type=jnp.float32) + b)
        h = h.astype(jnp.bfloat16)
    return jax.nn.sigmoid(jnp.dot(h, w4, preferred_element_type=jnp.float32) + b4)


def reference_forward_f32(x, params):
    """Pure f32, unpadded reference (original module semantics)."""
    out = x
    for (w, b) in params:
        out = jax.nn.sigmoid(out @ w + b)
    return out


if __name__ == "__main__":
    num_question = 128
    batch = 512        # two 256-row grid steps -> keeps both v7x TensorCores busy
    bm = 256

    key = jax.random.PRNGKey(0)
    key, kx = jax.random.split(key)
    raw_params = init_params(num_question, key)
    padded_params = pad_and_cast_params(raw_params, num_question)

    # "user vector" inputs in [0, 1], like the sparse answer matrix fed to the AE.
    x = jax.random.uniform(kx, (batch, num_question), jnp.float32)

    out = autoencoder_forward(x, padded_params, bm=bm)
    out = jax.block_until_ready(out)
    assert out.shape == (batch, num_question)

    # Bit-for-bit-ish check against a reference doing the same bf16/f32 math.
    ref_matched = reference_forward_matched(x, padded_params)
    assert jnp.allclose(out, ref_matched, atol=1e-4, rtol=1e-4), \
        "mismatch vs bf16-matched reference"

    # Semantics check against the original unpadded f32 module math
    # (looser tolerance only accounts for the bf16 operand cast).
    ref_f32 = reference_forward_f32(x, raw_params)
    assert jnp.allclose(out, ref_f32, atol=3e-2, rtol=3e-2), \
        "mismatch vs f32 reference"

    print("KERNEL_OK")
</pallas_src>

<mosaic_0001>
module attributes {stable_mosaic.version = 11 : i64} {
  func.func @_autoencoder_kernel(%arg0: i32, %arg1: memref<256x128xf32, #tpu.memory_space<vmem>>, %arg2: memref<128x128xbf16, #tpu.memory_space<vmem>>, %arg3: memref<1x128xf32, #tpu.memory_space<vmem>>, %arg4: memref<128x128xbf16, #tpu.memory_space<vmem>>, %arg5: memref<1x128xf32, #tpu.memory_space<vmem>>, %arg6: memref<128x128xbf16, #tpu.memory_space<vmem>>, %arg7: memref<1x128xf32, #tpu.memory_space<vmem>>, %arg8: memref<128x128xbf16, #tpu.memory_space<vmem>>, %arg9: memref<1x128xf32, #tpu.memory_space<vmem>>, %arg10: memref<256x128xf32, #tpu.memory_space<vmem>>) attributes {dimension_semantics = [#tpu.dimension_semantics<parallel>], iteration_bounds = array<i64: 2>, scalar_prefetch = 0 : i64, scratch_operands = 0 : i64, tpu.core_type = #tpu.core_type<tc>, window_params = [{transform_indices = @transform_0, window_bounds = array<i64: 256, 128>}, {pipeline_mode = #tpu.pipeline_mode<synchronous>, transform_indices = @transform_1, window_bounds = array<i64: 128, 128>}, {pipeline_mode = #tpu.pipeline_mode<synchronous>, transform_indices = @transform_2, window_bounds = array<i64: 1, 128>}, {pipeline_mode = #tpu.pipeline_mode<synchronous>, transform_indices = @transform_3, window_bounds = array<i64: 128, 128>}, {pipeline_mode = #tpu.pipeline_mode<synchronous>, transform_indices = @transform_4, window_bounds = array<i64: 1, 128>}, {pipeline_mode = #tpu.pipeline_mode<synchronous>, transform_indices = @transform_5, window_bounds = array<i64: 128, 128>}, {pipeline_mode = #tpu.pipeline_mode<synchronous>, transform_indices = @transform_6, window_bounds = array<i64: 1, 128>}, {pipeline_mode = #tpu.pipeline_mode<synchronous>, transform_indices = @transform_7, window_bounds = array<i64: 128, 128>}, {pipeline_mode = #tpu.pipeline_mode<synchronous>, transform_indices = @transform_8, window_bounds = array<i64: 1, 128>}, {transform_indices = @transform_9, window_bounds = array<i64: 256, 128>}]} {
    %c0 = arith.constant 0 : index
    %c0_0 = arith.constant 0 : index
    %0 = vector.load %arg1[%c0, %c0_0] : memref<256x128xf32, #tpu.memory_space<vmem>>, vector<256x128xf32>
    %1 = arith.truncf %0 : vector<256x128xf32> to vector<256x128xbf16>
    %c0_1 = arith.constant 0 : index
    %c0_2 = arith.constant 0 : index
    %2 = vector.load %arg3[%c0_1, %c0_2] : memref<1x128xf32, #tpu.memory_space<vmem>>, vector<1x128xf32>
    %c0_3 = arith.constant 0 : index
    %c0_4 = arith.constant 0 : index
    %3 = vector.load %arg5[%c0_3, %c0_4] : memref<1x128xf32, #tpu.memory_space<vmem>>, vector<1x128xf32>
    %c0_5 = arith.constant 0 : index
    %c0_6 = arith.constant 0 : index
    %4 = vector.load %arg7[%c0_5, %c0_6] : memref<1x128xf32, #tpu.memory_space<vmem>>, vector<1x128xf32>
    %c0_7 = arith.constant 0 : index
    %c0_8 = arith.constant 0 : index
    %5 = vector.load %arg9[%c0_7, %c0_8] : memref<1x128xf32, #tpu.memory_space<vmem>>, vector<1x128xf32>
    %c0_9 = arith.constant 0 : index
    %c0_10 = arith.constant 0 : index
    %6 = vector.load %arg2[%c0_9, %c0_10] : memref<128x128xbf16, #tpu.memory_space<vmem>>, vector<128x128xbf16>
    %cst = arith.constant dense<0.000000e+00> : vector<256x128xf32>
    %7 = tpu.matmul %1, %6, %cst {dimension_numbers = #tpu.dot_dimension_numbers<[1], [0], [0], [1], [0, 0, 1, 1], [], []>} : vector<256x128xbf16>, vector<128x128xbf16>, vector<256x128xf32> -> vector<256x128xf32>
    %8 = vector.broadcast %2 : vector<1x128xf32> to vector<256x128xf32>
    %9 = arith.addf %7, %8 : vector<256x128xf32>
    %10 = arith.negf %9 : vector<256x128xf32>
    %11 = math.exp %10 : vector<256x128xf32>
    %cst_11 = arith.constant 1.000000e+00 : f32
    %12 = vector.broadcast %cst_11 : f32 to vector<256x128xf32>
    %13 = arith.addf %12, %11 : vector<256x128xf32>
    %14 = arith.divf %12, %13 : vector<256x128xf32>
    %15 = arith.truncf %14 : vector<256x128xf32> to vector<256x128xbf16>
    %c0_12 = arith.constant 0 : index
    %c0_13 = arith.constant 0 : index
    %16 = vector.load %arg4[%c0_12, %c0_13] : memref<128x128xbf16, #tpu.memory_space<vmem>>, vector<128x128xbf16>
    %cst_14 = arith.constant dense<0.000000e+00> : vector<256x128xf32>
    %17 = tpu.matmul %15, %16, %cst_14 {dimension_numbers = #tpu.dot_dimension_numbers<[1], [0], [0], [1], [0, 0, 1, 1], [], []>} : vector<256x128xbf16>, vector<128x128xbf16>, vector<256x128xf32> -> vector<256x128xf32>
    %18 = vector.broadcast %3 : vector<1x128xf32> to vector<256x128xf32>
    %19 = arith.addf %17, %18 : vector<256x128xf32>
    %20 = arith.negf %19 : vector<256x128xf32>
    %21 = math.exp %20 : vector<256x128xf32>
    %cst_15 = arith.constant 1.000000e+00 : f32
    %22 = vector.broadcast %cst_15 : f32 to vector<256x128xf32>
    %23 = arith.addf %22, %21 : vector<256x128xf32>
    %24 = arith.divf %22, %23 : vector<256x128xf32>
    %25 = arith.truncf %24 : vector<256x128xf32> to vector<256x128xbf16>
    %c0_16 = arith.constant 0 : index
    %c0_17 = arith.constant 0 : index
    %26 = vector.load %arg6[%c0_16, %c0_17] : memref<128x128xbf16, #tpu.memory_space<vmem>>, vector<128x128xbf16>
    %cst_18 = arith.constant dense<0.000000e+00> : vector<256x128xf32>
    %27 = tpu.matmul %25, %26, %cst_18 {dimension_numbers = #tpu.dot_dimension_numbers<[1], [0], [0], [1], [0, 0, 1, 1], [], []>} : vector<256x128xbf16>, vector<128x128xbf16>, vector<256x128xf32> -> vector<256x128xf32>
    %28 = vector.broadcast %4 : vector<1x128xf32> to vector<256x128xf32>
    %29 = arith.addf %27, %28 : vector<256x128xf32>
    %30 = arith.negf %29 : vector<256x128xf32>
    %31 = math.exp %30 : vector<256x128xf32>
    %cst_19 = arith.constant 1.000000e+00 : f32
    %32 = vector.broadcast %cst_19 : f32 to vector<256x128xf32>
    %33 = arith.addf %32, %31 : vector<256x128xf32>
    %34 = arith.divf %32, %33 : vector<256x128xf32>
    %35 = arith.truncf %34 : vector<256x128xf32> to vector<256x128xbf16>
    %c0_20 = arith.constant 0 : index
    %c0_21 = arith.constant 0 : index
    %36 = vector.load %arg8[%c0_20, %c0_21] : memref<128x128xbf16, #tpu.memory_space<vmem>>, vector<128x128xbf16>
    %cst_22 = arith.constant dense<0.000000e+00> : vector<256x128xf32>
    %37 = tpu.matmul %35, %36, %cst_22 {dimension_numbers = #tpu.dot_dimension_numbers<[1], [0], [0], [1], [0, 0, 1, 1], [], []>} : vector<256x128xbf16>, vector<128x128xbf16>, vector<256x128xf32> -> vector<256x128xf32>
    %38 = vector.broadcast %5 : vector<1x128xf32> to vector<256x128xf32>
    %39 = arith.addf %37, %38 : vector<256x128xf32>
    %40 = arith.negf %39 : vector<256x128xf32>
    %41 = math.exp %40 : vector<256x128xf32>
    %cst_23 = arith.constant 1.000000e+00 : f32
    %42 = vector.broadcast %cst_23 : f32 to vector<256x128xf32>
    %43 = arith.addf %42, %41 : vector<256x128xf32>
    %44 = arith.divf %42, %43 : vector<256x128xf32>
    %c0_24 = arith.constant 0 : index
    %c0_25 = arith.constant 0 : index
    %45 = vector.load %arg10[%c0_24, %c0_25] : memref<256x128xf32, #tpu.memory_space<vmem>>, vector<256x128xf32>
    tpu.vector_store %arg10[%c0_24, %c0_25], %44 {strides = array<i32>} : memref<256x128xf32, #tpu.memory_space<vmem>>, vector<256x128xf32>,
    return
  }
  func.func @transform_0(%arg0: i32) -> (i32, i32) {
    %c0_i32 = arith.constant 0 : i32
    %c0_i32_0 = arith.constant 0 : i32
    return %arg0, %c0_i32 : i32, i32
  }
  func.func @transform_1(%arg0: i32) -> (i32, i32) {
    %c0_i32 = arith.constant 0 : i32
    %c0_i32_0 = arith.constant 0 : i32
    %c0_i32_1 = arith.constant 0 : i32
    return %c0_i32, %c0_i32_0 : i32, i32
  }
  func.func @transform_2(%arg0: i32) -> (i32, i32) {
    %c0_i32 = arith.constant 0 : i32
    %c0_i32_0 = arith.constant 0 : i32
    %c0_i32_1 = arith.constant 0 : i32
    return %c0_i32, %c0_i32_0 : i32, i32
  }
  func.func @transform_3(%arg0: i32) -> (i32, i32) {
    %c0_i32 = arith.constant 0 : i32
    %c0_i32_0 = arith.constant 0 : i32
    %c0_i32_1 = arith.constant 0 : i32
    return %c0_i32, %c0_i32_0 : i32, i32
  }
  func.func @transform_4(%arg0: i32) -> (i32, i32) {
    %c0_i32 = arith.constant 0 : i32
    %c0_i32_0 = arith.constant 0 : i32
    %c0_i32_1 = arith.constant 0 : i32
    return %c0_i32, %c0_i32_0 : i32, i32
  }
  func.func @transform_5(%arg0: i32) -> (i32, i32) {
    %c0_i32 = arith.constant 0 : i32
    %c0_i32_0 = arith.constant 0 : i32
    %c0_i32_1 = arith.constant 0 : i32
    return %c0_i32, %c0_i32_0 : i32, i32
  }
  func.func @transform_6(%arg0: i32) -> (i32, i32) {
    %c0_i32 = arith.constant 0 : i32
    %c0_i32_0 = arith.constant 0 : i32
    %c0_i32_1 = arith.constant 0 : i32
    return %c0_i32, %c0_i32_0 : i32, i32
  }
  func.func @transform_7(%arg0: i32) -> (i32, i32) {
    %c0_i32 = arith.constant 0 : i32
    %c0_i32_0 = arith.constant 0 : i32
    %c0_i32_1 = arith.constant 0 : i32
    return %c0_i32, %c0_i32_0 : i32, i32
  }
  func.func @transform_8(%arg0: i32) -> (i32, i32) {
    %c0_i32 = arith.constant 0 : i32
    %c0_i32_0 = arith.constant 0 : i32
    %c0_i32_1 = arith.constant 0 : i32
    return %c0_i32, %c0_i32_0 : i32, i32
  }
  func.func @transform_9(%arg0: i32) -> (i32, i32) {
    %c0_i32 = arith.constant 0 : i32
    %c0_i32_0 = arith.constant 0 : i32
    return %arg0, %c0_i32 : i32, i32
  }
}

</mosaic_0001>

<llo_original>
// kernel: tpu_custom_call.1
$region0: #{tpu_custom_call.1}
  #allocation0 [shape = 'u32[]', space=smem, size = 0x4, offset = 0x4, fixed_abs, tag = 'smem constant byte address 0x4 - core index']
  #allocation1 [shape = 'u32[144,128]{1,0:T(1,128)}', space=vmem, size = 0x12000, scoped, tag = 'internal scratch']
  %s0 = inlined_call_operand.hbm [shape: f32[512,128], index: 0, kind: input, shape index: {}]
  %s1 = inlined_call_operand.hbm [shape: bf16[128,128], index: 1, kind: input, shape index: {}]
  %s2 = inlined_call_operand.vmem [shape: f32[1,128], index: 2, kind: input, shape index: {}]
  %s3 = inlined_call_operand.hbm [shape: bf16[128,128], index: 3, kind: input, shape index: {}]
  %s4 = inlined_call_operand.vmem [shape: f32[1,128], index: 4, kind: input, shape index: {}]
  %s5 = inlined_call_operand.hbm [shape: bf16[128,128], index: 5, kind: input, shape index: {}]
  %s6 = inlined_call_operand.vmem [shape: f32[1,128], index: 6, kind: input, shape index: {}]
  %s7 = inlined_call_operand.hbm [shape: bf16[128,128], index: 7, kind: input, shape index: {}]
  %s8 = inlined_call_operand.vmem [shape: f32[1,128], index: 8, kind: input, shape index: {}]
  %s9 = inlined_call_operand.hbm [shape: f32[512,128], index: 9, kind: output, shape index: {}]
  %s10 = sld [smem:[#allocation0]]
  $region89: #{tpu_custom_call.1} parent=0
    _
  %s12 = ssub.s32 1, %s10
  %s13 = scalar_select 0, %s12, %s10
  $region1: #{tpu_custom_call.1} parent=0
    #allocation2 [shape = 'u8[262144]{0}', space=vmem, size = 0x40000, scoped, tag = 'input window, operand 0']
    #allocation3 [shape = 's32[2]{0}', space=sflag, size = 0x8, scoped, tag = 'scoped memory for tpu_custom_call.1']
    #allocation4 [shape = 's32[2]{0}', space=sflag, size = 0x8, scoped, tag = 'scoped memory for tpu_custom_call.1']
    #allocation5 [shape = 'u8[32768]{0}', space=vmem, size = 0x8000, scoped, tag = 'input window, operand 1, single buffered']
    #allocation6 [shape = 's32[1]{0}', space=sflag, size = 0x4, scoped, tag = 'scoped memory for tpu_custom_call.1']
    #allocation7 [shape = 'u8[32768]{0}', space=vmem, size = 0x8000, scoped, tag = 'input window, operand 3, single buffered']
    #allocation8 [shape = 'u8[32768]{0}', space=vmem, size = 0x8000, scoped, tag = 'input window, operand 5, single buffered']
    #allocation9 [shape = 's32[1]{0}', space=sflag, size = 0x4, scoped, tag = 'scoped memory for tpu_custom_call.1']
    #allocation10 [shape = 'u8[32768]{0}', space=vmem, size = 0x8000, scoped, tag = 'input window, operand 7, single buffered']
    #allocation11 [shape = 'u8[262144]{0}', space=vmem, size = 0x40000, scoped, tag = 'output window, operand 0']
    %14 = vsyncpa [#allocation3], 0
    %s15 = scalar_lea.sflag [#allocation3], 1
    %16 = vsyncpa %s15, 0
    %17 = vsyncpa [#allocation6], 0
    %18 = vsyncpa [#allocation9], 0
    %19 = vsyncpa [#allocation4], 0
    %s20 = scalar_lea.sflag [#allocation4], 1
    %21 = vsyncpa %s20, 0
    loop: start=0, step=1, limit=4
    $region2: #{tpu_custom_call.1} parent=1 // loop_pre_header
      _
    $region3: #{tpu_custom_call.1} parent=1 // loop_header
      %s23 = sphi 0, %s27
      %p24 = scmp.ge.s32.totalorder %s23, 4
      %s33 = sphi 0, %s35
      %s36 = sphi 0, %s33
      %s37 = sphi 0, %s36
      %s53 = sphi 0, %s37
      %s57 = sphi 0, %s57
      %s59 = sphi 0, %s57
      %s60 = sphi 0, %s59
      %s74 = sphi 0, %s60
      %s78 = sphi 0, %s78
      %s80 = sphi 0, %s78
      %s81 = sphi 0, %s80
      %s95 = sphi 0, %s81
      %s99 = sphi 0, %s99
      %s101 = sphi 0, %s99
      %s102 = sphi 0, %s101
      %s116 = sphi 0, %s102
      %s120 = sphi 0, %s120
      %s122 = sphi 0, %s120
      %s123 = sphi 0, %s122
      %s137 = sphi 0, %s123
      %s141 = sphi 0, %s141
      %s143 = sphi 0, %s141
      %s144 = sphi 0, %s143
      %s158 = sphi 0, %s144
      %s162 = sphi 0, %s162
      %s164 = sphi 0, %s162
      %s165 = sphi 0, %s164
      %s179 = sphi 0, %s165
      %s183 = sphi 0, %s183
      %s185 = sphi 0, %s183
      %s186 = sphi 0, %s185
      %s200 = sphi 0, %s186
      %s204 = sphi 0, %s204
      %s206 = sphi 0, %s204
      %s207 = sphi 0, %s206
      %s221 = sphi 0, %s207
      %s227 = sphi 0, %s229
      %s230 = sphi 0, %s227
      %s231 = sphi 0, %s230
      %s247 = sphi 0, %s231
    $region4: #{tpu_custom_call.1} parent=1 // loop_header_branch
      %26 = sbr.rel (%p24) target = $region8
    $region5: #{tpu_custom_call.1} parent=1 // loop_body
      %s28 = ssub.s32 %s23, 1
      %s29 = ssub.s32 %s23, 2
      %s30 = sadd.s32 %s23, 1
      %s31 = ssub.s32 %s23, %s30
      %p32 = scmp.eq.s32.totalorder %s31, 0
      %s34 = sadd.s32 %s33, 1
      %s35 = scalar_select %p32, %s33, %s34
      %p38 = pneg %p32
      %p39 = scmp.eq.s32.totalorder %s23, 1
      %p40 = por %p38, %p39
      %p41 = scmp.ne.s32.totalorder %s33, %s36
      %p42 = scmp.eq.s32.totalorder %s23, 0
      %p43 = por %p41, %p42
      %p44 = scmp.ne.s32.totalorder %s33, %s36
      %p45 = scmp.eq.s32.totalorder %s28, 1
      %p46 = por %p44, %p45
      %p47 = scmp.ne.s32.totalorder %s36, %s37
      %p48 = scmp.eq.s32.totalorder %s28, 0
      %p49 = por %p47, %p48
      %p50 = scmp.ne.s32.totalorder %s36, %s37
      %p51 = scmp.eq.s32.totalorder %s29, 1
      %p52 = por %p50, %p51
      %p54 = scmp.ne.s32.totalorder %s37, %s53
      %p55 = scmp.eq.s32.totalorder %s29, 0
      %p56 = por %p54, %p55
      %s58 = sadd.s32 %s57, 1
      %p61 = scmp.eq.s32.totalorder %s23, 1
      %p62 = scmp.ne.s32.totalorder %s57, %s59
      %p63 = scmp.eq.s32.totalorder %s23, 0
      %p64 = por %p62, %p63
      %p65 = scmp.ne.s32.totalorder %s57, %s59
      %p66 = scmp.eq.s32.totalorder %s28, 1
      %p67 = por %p65, %p66
      %p68 = scmp.ne.s32.totalorder %s59, %s60
      %p69 = scmp.eq.s32.totalorder %s28, 0
      %p70 = por %p68, %p69
      %p71 = scmp.ne.s32.totalorder %s59, %s60
      %p72 = scmp.eq.s32.totalorder %s29, 1
      %p73 = por %p71, %p72
      %p75 = scmp.ne.s32.totalorder %s60, %s74
      %p76 = scmp.eq.s32.totalorder %s29, 0
      %p77 = por %p75, %p76
      %s79 = sadd.s32 %s78, 1
      %p82 = scmp.eq.s32.totalorder %s23, 1
      %p83 = scmp.ne.s32.totalorder %s78, %s80
      %p84 = scmp.eq.s32.totalorder %s23, 0
      %p85 = por %p83, %p84
      %p86 = scmp.ne.s32.totalorder %s78, %s80
      %p87 = scmp.eq.s32.totalorder %s28, 1
      %p88 = por %p86, %p87
      %p89 = scmp.ne.s32.totalorder %s80, %s81
      %p90 = scmp.eq.s32.totalorder %s28, 0
      %p91 = por %p89, %p90
      %p92 = scmp.ne.s32.totalorder %s80, %s81
      %p93 = scmp.eq.s32.totalorder %s29, 1
      %p94 = por %p92, %p93
      %p96 = scmp.ne.s32.totalorder %s81, %s95
      %p97 = scmp.eq.s32.totalorder %s29, 0
      %p98 = por %p96, %p97
      %s100 = sadd.s32 %s99, 1
      %p103 = scmp.eq.s32.totalorder %s23, 1
      %p104 = scmp.ne.s32.totalorder %s99, %s101
      %p105 = scmp.eq.s32.totalorder %s23, 0
      %p106 = por %p104, %p105
      %p107 = scmp.ne.s32.totalorder %s99, %s101
      %p108 = scmp.eq.s32.totalorder %s28, 1
      %p109 = por %p107, %p108
      %p110 = scmp.ne.s32.totalorder %s101, %s102
      %p111 = scmp.eq.s32.totalorder %s28, 0
      %p112 = por %p110, %p111
      %p113 = scmp.ne.s32.totalorder %s101, %s102
      %p114 = scmp.eq.s32.totalorder %s29, 1
      %p115 = por %p113, %p114
      %p117 = scmp.ne.s32.totalorder %s102, %s116
      %p118 = scmp.eq.s32.totalorder %s29, 0
      %p119 = por %p117, %p118
      %s121 = sadd.s32 %s120, 1
      %p124 = scmp.eq.s32.totalorder %s23, 1
      %p125 = scmp.ne.s32.totalorder %s120, %s122
      %p126 = scmp.eq.s32.totalorder %s23, 0
      %p127 = por %p125, %p126
      %p128 = scmp.ne.s32.totalorder %s120, %s122
      %p129 = scmp.eq.s32.totalorder %s28, 1
      %p130 = por %p128, %p129
      %p131 = scmp.ne.s32.totalorder %s122, %s123
      %p132 = scmp.eq.s32.totalorder %s28, 0
      %p133 = por %p131, %p132
      %p134 = scmp.ne.s32.totalorder %s122, %s123
      %p135 = scmp.eq.s32.totalorder %s29, 1
      %p136 = por %p134, %p135
      %p138 = scmp.ne.s32.totalorder %s123, %s137
      %p139 = scmp.eq.s32.totalorder %s29, 0
      %p140 = por %p138, %p139
      %s142 = sadd.s32 %s141, 1
      %p145 = scmp.eq.s32.totalorder %s23, 1
      %p146 = scmp.ne.s32.totalorder %s141, %s143
      %p147 = scmp.eq.s32.totalorder %s23, 0
      %p148 = por %p146, %p147
      %p149 = scmp.ne.s32.totalorder %s141, %s143
      %p150 = scmp.eq.s32.totalorder %s28, 1
      %p151 = por %p149, %p150
      %p152 = scmp.ne.s32.totalorder %s143, %s144
      %p153 = scmp.eq.s32.totalorder %s28, 0
      %p154 = por %p152, %p153
      %p155 = scmp.ne.s32.totalorder %s143, %s144
      %p156 = scmp.eq.s32.totalorder %s29, 1
      %p157 = por %p155, %p156
      %p159 = scmp.ne.s32.totalorder %s144, %s158
      %p160 = scmp.eq.s32.totalorder %s29, 0
      %p161 = por %p159, %p160
      %s163 = sadd.s32 %s162, 1
      %p166 = scmp.eq.s32.totalorder %s23, 1
      %p167 = scmp.ne.s32.totalorder %s162, %s164
      %p168 = scmp.eq.s32.totalorder %s23, 0
      %p169 = por %p167, %p168
      %p170 = scmp.ne.s32.totalorder %s162, %s164
      %p171 = scmp.eq.s32.totalorder %s28, 1
      %p172 = por %p170, %p171
      %p173 = scmp.ne.s32.totalorder %s164, %s165
      %p174 = scmp.eq.s32.totalorder %s28, 0
      %p175 = por %p173, %p174
      %p176 = scmp.ne.s32.totalorder %s164, %s165
      %p177 = scmp.eq.s32.totalorder %s29, 1
      %p178 = por %p176, %p177
      %p180 = scmp.ne.s32.totalorder %s165, %s179
      %p181 = scmp.eq.s32.totalorder %s29, 0
      %p182 = por %p180, %p181
      %s184 = sadd.s32 %s183, 1
      %p187 = scmp.eq.s32.totalorder %s23, 1
      %p188 = scmp.ne.s32.totalorder %s183, %s185
      %p189 = scmp.eq.s32.totalorder %s23, 0
      %p190 = por %p188, %p189
      %p191 = scmp.ne.s32.totalorder %s183, %s185
      %p192 = scmp.eq.s32.totalorder %s28, 1
      %p193 = por %p191, %p192
      %p194 = scmp.ne.s32.totalorder %s185, %s186
      %p195 = scmp.eq.s32.totalorder %s28, 0
      %p196 = por %p194, %p195
      %p197 = scmp.ne.s32.totalorder %s185, %s186
      %p198 = scmp.eq.s32.totalorder %s29, 1
      %p199 = por %p197, %p198
      %p201 = scmp.ne.s32.totalorder %s186, %s200
      %p202 = scmp.eq.s32.totalorder %s29, 0
      %p203 = por %p201, %p202
      %s205 = sadd.s32 %s204, 1
      %p208 = scmp.eq.s32.totalorder %s23, 1
      %p209 = scmp.ne.s32.totalorder %s204, %s206
      %p210 = scmp.eq.s32.totalorder %s23, 0
      %p211 = por %p209, %p210
      %p212 = scmp.ne.s32.totalorder %s204, %s206
      %p213 = scmp.eq.s32.totalorder %s28, 1
      %p214 = por %p212, %p213
      %p215 = scmp.ne.s32.totalorder %s206, %s207
      %p216 = scmp.eq.s32.totalorder %s28, 0
      %p217 = por %p215, %p216
      %p218 = scmp.ne.s32.totalorder %s206, %s207
      %p219 = scmp.eq.s32.totalorder %s29, 1
      %p220 = por %p218, %p219
      %p222 = scmp.ne.s32.totalorder %s207, %s221
      %p223 = scmp.eq.s32.totalorder %s29, 0
      %p224 = por %p222, %p223
      %s225 = ssub.s32 %s23, %s30
      %p226 = scmp.eq.s32.totalorder %s225, 0
      %s228 = sadd.s32 %s227, 1
      %s229 = scalar_select %p226, %s227, %s228
      %p232 = pneg %p226
      %p233 = scmp.eq.s32.totalorder %s23, 1
      %p234 = por %p232, %p233
      %p235 = scmp.ne.s32.totalorder %s227, %s230
      %p236 = scmp.eq.s32.totalorder %s23, 0
      %p237 = por %p235, %p236
      %p238 = scmp.ne.s32.totalorder %s227, %s230
      %p239 = scmp.eq.s32.totalorder %s28, 1
      %p240 = por %p238, %p239
      %p241 = scmp.ne.s32.totalorder %s230, %s231
      %p242 = scmp.eq.s32.totalorder %s28, 0
      %p243 = por %p241, %p242
      %p244 = scmp.ne.s32.totalorder %s230, %s231
      %p245 = scmp.eq.s32.totalorder %s29, 1
      %p246 = por %p244, %p245
      %p248 = scmp.ne.s32.totalorder %s231, %s247
      %p249 = scmp.eq.s32.totalorder %s29, 0
      %p250 = por %p248, %p249
      %p251 = scmp.le.s32.totalorder 1, %s23
      %p252 = scmp.lt.s32.totalorder %s23, 3
      %p253 = pnand %p251, %p252
      %p254 = pneg %p253
      // Predicated region
      $region9: #{tpu_custom_call.1} parent=5 // pred_check
        _
      $region10: #{tpu_custom_call.1} parent=5 // pred_check_branch
        %256 = sbr.rel (%p253) target = $region12
      $region11: #{tpu_custom_call.1} parent=5 // pred_region
        %s257 = ssub.s32 %s23, 1
        // Predicated region
        $region13: #{tpu_custom_call.1} parent=11 // pred_check
          %p258 = pneg %p70
        $region14: #{tpu_custom_call.1} parent=11 // pred_check_branch
          %260 = sbr.rel (%p258) target = $region16
        $region15: #{tpu_custom_call.1} parent=11 // pred_region
          %s262 = ssub.s32 1024, 1024
          %263 = vsyncadd [#allocation6], %s262
          %s264 = sshll.u32 [#allocation5], 4
          %s265 = int_to_ptr.vmem [resolvable:$true] %s264
          %270 = dma.hbm_to_vmem [thread:$0]  %s1, 1024, %s265, [#allocation6], 64, 64, 4
        $region16: #{tpu_custom_call.1} parent=11 // pred_fallthru
          _
        // Predicated region
        $region17: #{tpu_custom_call.1} parent=11 // pred_check
          %p271 = pneg %p91
        $region18: #{tpu_custom_call.1} parent=11 // pred_check_branch
          %273 = sbr.rel (%p271) target = $region20
        $region19: #{tpu_custom_call.1} parent=11 // pred_region
          _
        $region20: #{tpu_custom_call.1} parent=11 // pred_fallthru
          _
        // Predicated region
        $region21: #{tpu_custom_call.1} parent=11 // pred_check
          %p274 = pneg %p112
        $region22: #{tpu_custom_call.1} parent=11 // pred_check_branch
          %276 = sbr.rel (%p274) target = $region24
        $region23: #{tpu_custom_call.1} parent=11 // pred_region
          %s278 = ssub.s32 1024, 1024
          %279 = vsyncadd [#allocation6], %s278
          %s280 = sshll.u32 [#allocation7], 4
          %s281 = int_to_ptr.vmem [resolvable:$true] %s280
          %286 = dma.hbm_to_vmem [thread:$0]  %s3, 1024, %s281, [#allocation6], 64, 64, 4
        $region24: #{tpu_custom_call.1} parent=11 // pred_fallthru
          _
        // Predicated region
        $region25: #{tpu_custom_call.1} parent=11 // pred_check
          %p287 = pneg %p133
        $region26: #{tpu_custom_call.1} parent=11 // pred_check_branch
          %289 = sbr.rel (%p287) target = $region28
        $region27: #{tpu_custom_call.1} parent=11 // pred_region
          _
        $region28: #{tpu_custom_call.1} parent=11 // pred_fallthru
          _
        // Predicated region
        $region29: #{tpu_custom_call.1} parent=11 // pred_check
          %p290 = pneg %p154
        $region30: #{tpu_custom_call.1} parent=11 // pred_check_branch
          %292 = sbr.rel (%p290) target = $region32
        $region31: #{tpu_custom_call.1} parent=11 // pred_region
          %s294 = ssub.s32 1024, 1024
          %295 = vsyncadd [#allocation9], %s294
          %s296 = sshll.u32 [#allocation8], 4
          %s297 = int_to_ptr.vmem [resolvable:$true] %s296
          %302 = dma.hbm_to_vmem [thread:$0]  %s5, 1024, %s297, [#allocation9], 64, 64, 4
        $region32: #{tpu_custom_call.1} parent=11 // pred_fallthru
          _
        // Predicated region
        $region33: #{tpu_custom_call.1} parent=11 // pred_check
          %p303 = pneg %p175
        $region34: #{tpu_custom_call.1} parent=11 // pred_check_branch
          %305 = sbr.rel (%p303) target = $region36
        $region35: #{tpu_custom_call.1} parent=11 // pred_region
          _
        $region36: #{tpu_custom_call.1} parent=11 // pred_fallthru
          _
        // Predicated region
        $region37: #{tpu_custom_call.1} parent=11 // pred_check
          %p306 = pneg %p196
        $region38: #{tpu_custom_call.1} parent=11 // pred_check_branch
          %308 = sbr.rel (%p306) target = $region40
        $region39: #{tpu_custom_call.1} parent=11 // pred_region
          %s310 = ssub.s32 1024, 1024
          %311 = vsyncadd [#allocation9], %s310
          %s312 = sshll.u32 [#allocation10], 4
          %s313 = int_to_ptr.vmem [resolvable:$true] %s312
          %318 = dma.hbm_to_vmem [thread:$0]  %s7, 1024, %s313, [#allocation9], 64, 64, 4
        $region40: #{tpu_custom_call.1} parent=11 // pred_fallthru
          _
        // Predicated region
        $region41: #{tpu_custom_call.1} parent=11 // pred_check
          %p319 = pneg %p217
        $region42: #{tpu_custom_call.1} parent=11 // pred_check_branch
          %321 = sbr.rel (%p319) target = $region44
        $region43: #{tpu_custom_call.1} parent=11 // pred_region
          _
        $region44: #{tpu_custom_call.1} parent=11 // pred_fallthru
          _
      $region12: #{tpu_custom_call.1} parent=5 // pred_fallthru
        _
      %p322 = scmp.lt.s32.totalorder %s23, 2
      // Predicated region
      $region45: #{tpu_custom_call.1} parent=5 // pred_check
        %p323 = pneg %p322
      $region46: #{tpu_custom_call.1} parent=5 // pred_check_branch
        %325 = sbr.rel (%p323) target = $region48
      $region47: #{tpu_custom_call.1} parent=5 // pred_region
        // Predicated region
        $region49: #{tpu_custom_call.1} parent=47 // pred_check
          %p326 = pneg %p43
        $region50: #{tpu_custom_call.1} parent=47 // pred_check_branch
          %328 = sbr.rel (%p326) target = $region52
        $region51: #{tpu_custom_call.1} parent=47 // pred_region
          %s329 = sand.u32 %s33, 1
          %s330 = scalar_lea.sflag [#allocation3], %s329
          %s331 = sand.u32 %s33, 1
          %s332 = smul.addr %s331, 256
          %s333 = scalar_lea.vmem [#allocation2], %s332
          %s334 = smul.u32 32, %s23
          %s336 = ssub.s32 4096, 4096
          %337 = vsyncadd %s330, %s336
          %s338 = smul.addr %s334, 128
          %s339 = scalar_lea.hbm %s0, %s338
          %s340 = sshll.u32 %s333, 4
          %s341 = int_to_ptr.vmem [resolvable:$true] %s340
          %346 = dma.hbm_to_vmem [thread:$0]  %s339, 4096, %s341, %s330, 128, 128, 8
        $region52: #{tpu_custom_call.1} parent=47 // pred_fallthru
          _
      $region48: #{tpu_custom_call.1} parent=5 // pred_fallthru
        _
      %p347 = scmp.le.s32.totalorder 1, %s23
      %p348 = scmp.lt.s32.totalorder %s23, 3
      %p349 = pnand %p347, %p348
      %p350 = pneg %p349
      // Predicated region
      $region53: #{tpu_custom_call.1} parent=5 // pred_check
        _
      $region54: #{tpu_custom_call.1} parent=5 // pred_check_branch
        %352 = sbr.rel (%p349) target = $region56
      $region55: #{tpu_custom_call.1} parent=5 // pred_region
        %s353 = ssub.s32 %s23, 1
        %s354 = sand.u32 %s36, 1
        %s355 = scalar_lea.sflag [#allocation3], %s354
        %s356 = sand.u32 %s36, 1
        %s357 = smul.addr %s356, 256
        %s358 = scalar_lea.vmem [#allocation2], %s357
        // Predicated region
        $region57: #{tpu_custom_call.1} parent=55 // pred_check
          %p359 = pneg %p49
        $region58: #{tpu_custom_call.1} parent=55 // pred_check_branch
          %361 = sbr.rel (%p359) target = $region60
        $region59: #{tpu_custom_call.1} parent=55 // pred_region
          %362 = dma.done %s355, 4096
        $region60: #{tpu_custom_call.1} parent=55 // pred_fallthru
          _
        // Predicated region
        $region61: #{tpu_custom_call.1} parent=55 // pred_check
          %p363 = pneg %p70
        $region62: #{tpu_custom_call.1} parent=55 // pred_check_branch
          %365 = sbr.rel (%p363) target = $region64
        $region63: #{tpu_custom_call.1} parent=55 // pred_region
          %366 = dma.done [#allocation6], 1024
        $region64: #{tpu_custom_call.1} parent=55 // pred_fallthru
          _
        // Predicated region
        $region65: #{tpu_custom_call.1} parent=55 // pred_check
          %p367 = pneg %p112
        $region66: #{tpu_custom_call.1} parent=55 // pred_check_branch
          %369 = sbr.rel (%p367) target = $region68
        $region67: #{tpu_custom_call.1} parent=55 // pred_region
          %370 = dma.done [#allocation6], 1024
        $region68: #{tpu_custom_call.1} parent=55 // pred_fallthru
          _
        // Predicated region
        $region69: #{tpu_custom_call.1} parent=55 // pred_check
          %p371 = pneg %p154
        $region70: #{tpu_custom_call.1} parent=55 // pred_check_branch
          %373 = sbr.rel (%p371) target = $region72
        $region71: #{tpu_custom_call.1} parent=55 // pred_region
          %374 = dma.done [#allocation9], 1024
        $region72: #{tpu_custom_call.1} parent=55 // pred_fallthru
          _
        // Predicated region
        $region73: #{tpu_custom_call.1} parent=55 // pred_check
          %p375 = pneg %p196
        $region74: #{tpu_custom_call.1} parent=55 // pred_check_branch
          %377 = sbr.rel (%p375) target = $region76
        $region75: #{tpu_custom_call.1} parent=55 // pred_region
          %378 = dma.done [#allocation9], 1024
        $region76: #{tpu_custom_call.1} parent=55 // pred_fallthru
          _
        %s379 = sand.u32 %s36, 1
        %s380 = scalar_lea.sflag [#allocation3], %s379
        %s381 = sand.u32 %s36, 1
        %s382 = smul.addr %s381, 256
        %s383 = scalar_lea.vmem [#allocation2], %s382
        %p384 = pneg %p49
        %p385 = pneg %p46
        %p386 = pneg %p70
        %p387 = pneg %p67
        %p388 = pneg %p91
        %p389 = pneg %p88
        %p390 = pneg %p112
        %p391 = pneg %p109
        %p392 = pneg %p133
        %p393 = pneg %p130
        %p394 = pneg %p154
        %p395 = pneg %p151
        %p396 = pneg %p175
        %p397 = pneg %p172
        %p398 = pneg %p196
        %p399 = pneg %p193
        %p400 = pneg %p217
        %p401 = pneg %p214
        %p402 = pneg %p243
        %p403 = pneg %p240
        %s404 = sand.u32 %s230, 1
        %s405 = scalar_lea.sflag [#allocation4], %s404
        %s406 = sand.u32 %s230, 1
        %s407 = smul.addr %s406, 256
        %s408 = scalar_lea.vmem [#allocation11], %s407
        %s409 = smul.u32 32, %s28
        %s410 = smul.u32 32, %s28
        %v412 = vld [vmem:[%s358] sm:$0xff]
        %v413 = vld [vmem:[%s358 + $0x8] sm:$0xff]
        %v414 = vld [vmem:[%s358 + $0x10] sm:$0xff]
        %v415 = vld [vmem:[%s358 + $0x18] sm:$0xff]
        %v416 = vld [vmem:[%s358 + $0x20] sm:$0xff]
        %v417 = vld [vmem:[%s358 + $0x28] sm:$0xff]
        %v418 = vld [vmem:[%s358 + $0x30] sm:$0xff]
        %v419 = vld [vmem:[%s358 + $0x38] sm:$0xff]
        %v420 = vld [vmem:[%s358 + $0x40] sm:$0xff]
        %v421 = vld [vmem:[%s358 + $0x48] sm:$0xff]
        %v422 = vld [vmem:[%s358 + $0x50] sm:$0xff]
        %v423 = vld [vmem:[%s358 + $0x58] sm:$0xff]
        %v424 = vld [vmem:[%s358 + $0x60] sm:$0xff]
        %v425 = vld [vmem:[%s358 + $0x68] sm:$0xff]
        %v426 = vld [vmem:[%s358 + $0x70] sm:$0xff]
        %v427 = vld [vmem:[%s358 + $0x78] sm:$0xff]
        %v428 = vld [vmem:[%s358 + $0x80] sm:$0xff]
        %v429 = vld [vmem:[%s358 + $0x88] sm:$0xff]
        %v430 = vld [vmem:[%s358 + $0x90] sm:$0xff]
        %v431 = vld [vmem:[%s358 + $0x98] sm:$0xff]
        %v432 = vld [vmem:[%s358 + $0xa0] sm:$0xff]
        %v433 = vld [vmem:[%s358 + $0xa8] sm:$0xff]
        %v434 = vld [vmem:[%s358 + $0xb0] sm:$0xff]
        %v435 = vld [vmem:[%s358 + $0xb8] sm:$0xff]
        %v436 = vld [vmem:[%s358 + $0xc0] sm:$0xff]
        %v437 = vld [vmem:[%s358 + $0xc8] sm:$0xff]
        %v438 = vld [vmem:[%s358 + $0xd0] sm:$0xff]
        %v439 = vld [vmem:[%s358 + $0xd8] sm:$0xff]
        %v440 = vld [vmem:[%s358 + $0xe0] sm:$0xff]
        %v441 = vld [vmem:[%s358 + $0xe8] sm:$0xff]
        %v442 = vld [vmem:[%s358 + $0xf0] sm:$0xff]
        %v443 = vld [vmem:[%s358 + $0xf8] sm:$0xff]
        %v444 = vpack.c.bf16 %v413, %v412
        %v445 = vpack.c.bf16 %v415, %v414
        %v446 = vpack.c.bf16 %v417, %v416
        %v447 = vpack.c.bf16 %v419, %v418
        %v448 = vpack.c.bf16 %v421, %v420
        %v449 = vpack.c.bf16 %v423, %v422
        %v450 = vpack.c.bf16 %v425, %v424
        %v451 = vpack.c.bf16 %v427, %v426
        %v452 = vpack.c.bf16 %v429, %v428
        %v453 = vpack.c.bf16 %v431, %v430
        %v454 = vpack.c.bf16 %v433, %v432
        %v455 = vpack.c.bf16 %v435, %v434
        %v456 = vpack.c.bf16 %v437, %v436
        %v457 = vpack.c.bf16 %v439, %v438
        %v458 = vpack.c.bf16 %v441, %v440
        %v459 = vpack.c.bf16 %v443, %v442
        %v460 = vld [vmem:[%s2] sm:$0x1]
        %v461 = vld [vmem:[%s4] sm:$0x1]
        %v462 = vld [vmem:[%s6] sm:$0x1]
        %v463 = vld [vmem:[%s8] sm:$0x1]
        %v464 = vld [vmem:[#allocation5] sm:$0xf]
        %v465 = vld [vmem:[#allocation5 + $0x4] sm:$0xf]
        %v466 = vld [vmem:[#allocation5 + $0x8] sm:$0xf]
        %v467 = vld [vmem:[#allocation5 + $0xc] sm:$0xf]
        %v468 = vld [vmem:[#allocation5 + $0x10] sm:$0xf]
        %v469 = vld [vmem:[#allocation5 + $0x14] sm:$0xf]
        %v470 = vld [vmem:[#allocation5 + $0x18] sm:$0xf]
        %v471 = vld [vmem:[#allocation5 + $0x1c] sm:$0xf]
        %v472 = vld [vmem:[#allocation5 + $0x20] sm:$0xf]
        %v473 = vld [vmem:[#allocation5 + $0x24] sm:$0xf]
        %v474 = vld [vmem:[#allocation5 + $0x28] sm:$0xf]
        %v475 = vld [vmem:[#allocation5 + $0x2c] sm:$0xf]
        %v476 = vld [vmem:[#allocation5 + $0x30] sm:$0xf]
        %v477 = vld [vmem:[#allocation5 + $0x34] sm:$0xf]
        %v478 = vld [vmem:[#allocation5 + $0x38] sm:$0xf]
        %v479 = vld [vmem:[#allocation5 + $0x3c] sm:$0xf]
        %v481 = vlaneseq
        %v482 = vshrl.u32 %v481, 7
        %v483 = vsub.s32 0, %v482
        %v484 = vrot.slane %v460, %v483
        %v502 = vunpack.c.l.b16 %v464
        %v503 = vunpack.c.l.b16 %v465
        %v504 = vunpack.c.l.b16 %v466
        %v505 = vunpack.c.l.b16 %v467
        %v506 = vunpack.c.l.b16 %v468
        %v507 = vunpack.c.l.b16 %v469
        %v508 = vunpack.c.l.b16 %v470
        %v509 = vunpack.c.l.b16 %v471
        %v510 = vunpack.c.l.b16 %v472
        %v511 = vunpack.c.l.b16 %v473
        %v512 = vunpack.c.l.b16 %v474
        %v513 = vunpack.c.l.b16 %v475
        %v514 = vunpack.c.l.b16 %v476
        %v515 = vunpack.c.l.b16 %v477
        %v516 = vunpack.c.l.b16 %v478
        %v517 = vunpack.c.l.b16 %v479
        %v518 = vpack.c.b16 %v503, %v502
        %v519 = vpack.c.b16 %v505, %v504
        %v520 = vpack.c.b16 %v507, %v506
        %v521 = vpack.c.b16 %v509, %v508
        %v522 = vpack.c.b16 %v511, %v510
        %v523 = vpack.c.b16 %v513, %v512
        %v524 = vpack.c.b16 %v515, %v514
        %v525 = vpack.c.b16 %v517, %v516
        %534 = vmatprep.subr.bf16.mxu0 0
        %535 = vmatpush1.bf16.msra.mxu0 %v518
        %536 = vmatprep.subr.bf16.mxu0 0
        %537 = vmatpush1.bf16.msra.mxu0 %v519
        %538 = vmatprep.subr.bf16.mxu0 0
        %539 = vmatpush1.bf16.msra.mxu0 %v520
        %540 = vmatprep.subr.bf16.mxu0 0
        %541 = vmatpush1.bf16.msra.mxu0 %v521
        %542 = vmatprep.subr.bf16.mxu0 0
        %543 = vmatpush1.bf16.msra.mxu0 %v522
        %544 = vmatprep.subr.bf16.mxu0 0
        %545 = vmatpush1.bf16.msra.mxu0 %v523
        %546 = vmatprep.subr.bf16.mxu0 0
        %547 = vmatpush1.bf16.msra.mxu0 %v524
        %548 = vmatprep.subr.bf16.mxu0 0
        %549 = vmatpush1.bf16.msra.mxu0 %v525
        %550 = vmatprep.subr.bf16.mxu0 0
        %551 = vmatpush1.bf16.msra.mxu0 0
        %552 = vmatprep.subr.bf16.mxu0 0
        %553 = vmatpush1.bf16.msra.mxu0 0
        %554 = vmatprep.subr.bf16.mxu0 0
        %555 = vmatpush1.bf16.msra.mxu0 0
        %556 = vmatprep.subr.bf16.mxu0 0
        %557 = vmatpush1.bf16.msra.mxu0 0
        %558 = vmatprep.subr.bf16.mxu0 0
        %559 = vmatpush1.bf16.msra.mxu0 0
        %560 = vmatprep.subr.bf16.mxu0 0
        %561 = vmatpush1.bf16.msra.mxu0 0
        %562 = vmatprep.subr.bf16.mxu0 0
        %563 = vmatpush1.bf16.msra.mxu0 0
        %564 = vmatprep.subr.bf16.mxu0 0
        %565 = vmatpush1.bf16.msra.mxu0 0
        %566 = vmatprep.mubr.bf16.mxu0 0
        %567 = vmatmul.mubr.bf16.gmra.mrb[0].mxu0 %v444
        %v568 = vpop.f32.mrb[0].mxu0
        %v569 = vadd.f32 %v484, %v568
        %v570 = vpop.f32.mrb[0].mxu0
        %v571 = vpop.f32.mrb[0].mxu0
        %v572 = vadd.f32 %v484, %v571
        %v573 = vpop.f32.mrb[0].mxu0
        %574 = vmatprep.mubr.bf16.mxu0 0
        %575 = vmatmul.mubr.bf16.gmra.mrb[0].mxu0 %v445
        %v576 = vpop.f32.mrb[0].mxu0
        %v577 = vadd.f32 %v484, %v576
        %v578 = vpop.f32.mrb[0].mxu0
        %v579 = vpop.f32.mrb[0].mxu0
        %v580 = vadd.f32 %v484, %v579
        %v581 = vpop.f32.mrb[0].mxu0
        %582 = vmatprep.mubr.bf16.mxu0 0
        %583 = vmatmul.mubr.bf16.gmra.mrb[0].mxu0 %v446
        %v584 = vpop.f32.mrb[0].mxu0
        %v585 = vadd.f32 %v484, %v584
        %v586 = vpop.f32.mrb[0].mxu0
        %v587 = vpop.f32.mrb[0].mxu0
        %v588 = vadd.f32 %v484, %v587
        %v589 = vpop.f32.mrb[0].mxu0
        %590 = vmatprep.mubr.bf16.mxu0 0
        %591 = vmatmul.mubr.bf16.gmra.mrb[0].mxu0 %v447
        %v592 = vpop.f32.mrb[0].mxu0
        %v593 = vadd.f32 %v484, %v592
        %v594 = vpop.f32.mrb[0].mxu0
        %v595 = vpop.f32.mrb[0].mxu0
        %v596 = vadd.f32 %v484, %v595
        %v597 = vpop.f32.mrb[0].mxu0
        %598 = vmatprep.mubr.bf16.mxu0 0
        %599 = vmatmul.mubr.bf16.gmra.mrb[0].mxu0 %v448
        %v600 = vpop.f32.mrb[0].mxu0
        %v601 = vadd.f32 %v484, %v600
        %v602 = vpop.f32.mrb[0].mxu0
        %v603 = vpop.f32.mrb[0].mxu0
        %v604 = vadd.f32 %v484, %v603
        %v605 = vpop.f32.mrb[0].mxu0
        %606 = vmatprep.mubr.bf16.mxu0 0
        %607 = vmatmul.mubr.bf16.gmra.mrb[0].mxu0 %v449
        %v608 = vpop.f32.mrb[0].mxu0
        %v609 = vadd.f32 %v484, %v608
        %v610 = vpop.f32.mrb[0].mxu0
        %v611 = vpop.f32.mrb[0].mxu0
        %v612 = vadd.f32 %v484, %v611
        %v613 = vpop.f32.mrb[0].mxu0
        %614 = vmatprep.mubr.bf16.mxu0 0
        %615 = vmatmul.mubr.bf16.gmra.mrb[0].mxu0 %v450
        %v616 = vpop.f32.mrb[0].mxu0
        %v617 = vadd.f32 %v484, %v616
        %v618 = vpop.f32.mrb[0].mxu0
        %v619 = vpop.f32.mrb[0].mxu0
        %v620 = vadd.f32 %v484, %v619
        %v621 = vpop.f32.mrb[0].mxu0
        %622 = vmatprep.mubr.bf16.mxu0 0
        %623 = vmatmul.mubr.bf16.gmra.mrb[0].mxu0 %v451
        %v624 = vpop.f32.mrb[0].mxu0
        %v625 = vadd.f32 %v484, %v624
        %v626 = vpop.f32.mrb[0].mxu0
        %v627 = vpop.f32.mrb[0].mxu0
        %v628 = vadd.f32 %v484, %v627
        %v629 = vpop.f32.mrb[0].mxu0
        %630 = vmatprep.mubr.bf16.mxu0 0
        %631 = vmatmul.mubr.bf16.gmra.mrb[0].mxu0 %v452
        %v632 = vpop.f32.mrb[0].mxu0
        %v633 = vadd.f32 %v484, %v632
        %v634 = vpop.f32.mrb[0].mxu0
        %v635 = vpop.f32.mrb[0].mxu0
        %v636 = vadd.f32 %v484, %v635
        %v637 = vpop.f32.mrb[0].mxu0
        %638 = vmatprep.mubr.bf16.mxu0 0
        %639 = vmatmul.mubr.bf16.gmra.mrb[0].mxu0 %v453
        %v640 = vpop.f32.mrb[0].mxu0
        %v641 = vadd.f32 %v484, %v640
        %v642 = vpop.f32.mrb[0].mxu0
        %v643 = vpop.f32.mrb[0].mxu0
        %v644 = vadd.f32 %v484, %v643
        %v645 = vpop.f32.mrb[0].mxu0
        %646 = vmatprep.mubr.bf16.mxu0 0
        %647 = vmatmul.mubr.bf16.gmra.mrb[0].mxu0 %v454
        %v648 = vpop.f32.mrb[0].mxu0
        %v649 = vadd.f32 %v484, %v648
        %v650 = vpop.f32.mrb[0].mxu0
        %v651 = vpop.f32.mrb[0].mxu0
        %v652 = vadd.f32 %v484, %v651
        %v653 = vpop.f32.mrb[0].mxu0
        %654 = vmatprep.mubr.bf16.mxu0 0
        %655 = vmatmul.mubr.bf16.gmra.mrb[0].mxu0 %v455
        %v656 = vpop.f32.mrb[0].mxu0
        %v657 = vadd.f32 %v484, %v656
        %v658 = vpop.f32.mrb[0].mxu0
        %v659 = vpop.f32.mrb[0].mxu0
        %v660 = vadd.f32 %v484, %v659
        %v661 = vpop.f32.mrb[0].mxu0
        %662 = vmatprep.mubr.bf16.mxu0 0
        %663 = vmatmul.mubr.bf16.gmra.mrb[0].mxu0 %v456
        %v664 = vpop.f32.mrb[0].mxu0
        %v665 = vadd.f32 %v484, %v664
        %v666 = vpop.f32.mrb[0].mxu0
        %v667 = vpop.f32.mrb[0].mxu0
        %v668 = vadd.f32 %v484, %v667
        %v669 = vpop.f32.mrb[0].mxu0
        %670 = vmatprep.mubr.bf16.mxu0 0
        %671 = vmatmul.mubr.bf16.gmra.mrb[0].mxu0 %v457
        %v672 = vpop.f32.mrb[0].mxu0
        %v673 = vadd.f32 %v484, %v672
        %v674 = vpop.f32.mrb[0].mxu0
        %v675 = vpop.f32.mrb[0].mxu0
        %v676 = vadd.f32 %v484, %v675
        %v677 = vpop.f32.mrb[0].mxu0
        %678 = vmatprep.mubr.bf16.mxu0 0
        %679 = vmatmul.mubr.bf16.gmra.mrb[0].mxu0 %v458
        %v680 = vpop.f32.mrb[0].mxu0
        %v681 = vadd.f32 %v484, %v680
        %v682 = vpop.f32.mrb[0].mxu0
        %v683 = vpop.f32.mrb[0].mxu0
        %v684 = vadd.f32 %v484, %v683
        %v685 = vpop.f32.mrb[0].mxu0
        %686 = vmatprep.mubr.bf16.mxu0 0
        %687 = vmatmul.mubr.bf16.gmra.mrb[0].mxu0 %v459
        %v688 = vpop.f32.mrb[0].mxu0
        %v689 = vadd.f32 %v484, %v688
        %v690 = vpop.f32.mrb[0].mxu0
        %v691 = vpop.f32.mrb[0].mxu0
        %v692 = vadd.f32 %v484, %v691
        %v693 = vpop.f32.mrb[0].mxu0
        %694 = vdwg.mxu0
        %v695 = vxor.u32 %v569, 2147483648
        %v696 = vxor.u32 %v572, 2147483648
        %v697 = vxor.u32 %v577, 2147483648
        %v698 = vxor.u32 %v580, 2147483648
        %v699 = vxor.u32 %v585, 2147483648
        %v700 = vxor.u32 %v588, 2147483648
        %v701 = vxor.u32 %v593, 2147483648
        %v702 = vxor.u32 %v596, 2147483648
        %v703 = vxor.u32 %v601, 2147483648
        %v704 = vxor.u32 %v604, 2147483648
        %v705 = vxor.u32 %v609, 2147483648
        %v706 = vxor.u32 %v612, 2147483648
        %v707 = vxor.u32 %v617, 2147483648
        %v708 = vxor.u32 %v620, 2147483648
        %v709 = vxor.u32 %v625, 2147483648
        %v710 = vxor.u32 %v628, 2147483648
        %v711 = vxor.u32 %v633, 2147483648
        %v712 = vxor.u32 %v636, 2147483648
        %v713 = vxor.u32 %v641, 2147483648
        %v714 = vxor.u32 %v644, 2147483648
        %v715 = vxor.u32 %v649, 2147483648
        %v716 = vxor.u32 %v652, 2147483648
        %v717 = vxor.u32 %v657, 2147483648
        %v718 = vxor.u32 %v660, 2147483648
        %v719 = vxor.u32 %v665, 2147483648
        %v720 = vxor.u32 %v668, 2147483648
        %v721 = vxor.u32 %v673, 2147483648
        %v722 = vxor.u32 %v676, 2147483648
        %v723 = vxor.u32 %v681, 2147483648
        %v724 = vxor.u32 %v684, 2147483648
        %v725 = vxor.u32 %v689, 2147483648
        %v726 = vxor.u32 %v692, 2147483648
        %v727 = vmul.f32 %v695, 1.442695
        %v728 = vpow.pop %v727
        %v729 = vmul.f32 %v696, 1.442695
        %v730 = vpow.pop %v729
        %v731 = vmul.f32 %v697, 1.442695
        %v732 = vpow.pop %v731
        %v733 = vmul.f32 %v698, 1.442695
        %v734 = vpow.pop %v733
        %v735 = vmul.f32 %v699, 1.442695
        %v736 = vpow.pop %v735
        %v737 = vmul.f32 %v700, 1.442695
        %v738 = vpow.pop %v737
        %v739 = vmul.f32 %v701, 1.442695
        %v740 = vpow.pop %v739
        %v741 = vmul.f32 %v702, 1.442695
        %v742 = vpow.pop %v741
        %v743 = vmul.f32 %v703, 1.442695
        %v744 = vpow.pop %v743
        %v745 = vmul.f32 %v704, 1.442695
        %v746 = vpow.pop %v745
        %v747 = vmul.f32 %v705, 1.442695
        %v748 = vpow.pop %v747
        %v749 = vmul.f32 %v706, 1.442695
        %v750 = vpow.pop %v749
        %v751 = vmul.f32 %v707, 1.442695
        %v752 = vpow.pop %v751
        %v753 = vmul.f32 %v708, 1.442695
        %v754 = vpow.pop %v753
        %v755 = vmul.f32 %v709, 1.442695
        %v756 = vpow.pop %v755
        %v757 = vmul.f32 %v710, 1.442695
        %v758 = vpow.pop %v757
        %v759 = vmul.f32 %v711, 1.442695
        %v760 = vpow.pop %v759
        %v761 = vmul.f32 %v712, 1.442695
        %v762 = vpow.pop %v761
        %v763 = vmul.f32 %v713, 1.442695
        %v764 = vpow.pop %v763
        %v765 = vmul.f32 %v714, 1.442695
        %v766 = vpow.pop %v765
        %v767 = vmul.f32 %v715, 1.442695
        %v768 = vpow.pop %v767
        %v769 = vmul.f32 %v716, 1.442695
        %v770 = vpow.pop %v769
        %v771 = vmul.f32 %v717, 1.442695
        %v772 = vpow.pop %v771
        %v773 = vmul.f32 %v718, 1.442695
        %v774 = vpow.pop %v773
        %v775 = vmul.f32 %v719, 1.442695
        %v776 = vpow.pop %v775
        %v777 = vmul.f32 %v720, 1.442695
        %v778 = vpow.pop %v777
        %v779 = vmul.f32 %v721, 1.442695
        %v780 = vpow.pop %v779
        %v781 = vmul.f32 %v722, 1.442695
        %v782 = vpow.pop %v781
        %v783 = vmul.f32 %v723, 1.442695
        %v784 = vpow.pop %v783
        %v785 = vmul.f32 %v724, 1.442695
        %v786 = vpow.pop %v785
        %v787 = vmul.f32 %v725, 1.442695
        %v788 = vpow.pop %v787
        %v789 = vmul.f32 %v726, 1.442695
        %v790 = vpow.pop %v789
        %v791 = vadd.f32 %v728, 1.0
        %v792 = vadd.f32 %v730, 1.0
        %v793 = vadd.f32 %v732, 1.0
        %v794 = vadd.f32 %v734, 1.0
        %v795 = vadd.f32 %v736, 1.0
        %v796 = vadd.f32 %v738, 1.0
        %v797 = vadd.f32 %v740, 1.0
        %v798 = vadd.f32 %v742, 1.0
        %v799 = vadd.f32 %v744, 1.0
        %v800 = vadd.f32 %v746, 1.0
        %v801 = vadd.f32 %v748, 1.0
        %v802 = vadd.f32 %v750, 1.0
        %v803 = vadd.f32 %v752, 1.0
        %v804 = vadd.f32 %v754, 1.0
        %v805 = vadd.f32 %v756, 1.0
        %v806 = vadd.f32 %v758, 1.0
        %v807 = vadd.f32 %v760, 1.0
        %v808 = vadd.f32 %v762, 1.0
        %v809 = vadd.f32 %v764, 1.0
        %v810 = vadd.f32 %v766, 1.0
        %v811 = vadd.f32 %v768, 1.0
        %v812 = vadd.f32 %v770, 1.0
        %v813 = vadd.f32 %v772, 1.0
        %v814 = vadd.f32 %v774, 1.0
        %v815 = vadd.f32 %v776, 1.0
        %v816 = vadd.f32 %v778, 1.0
        %v817 = vadd.f32 %v780, 1.0
        %v818 = vadd.f32 %v782, 1.0
        %v819 = vadd.f32 %v784, 1.0
        %v820 = vadd.f32 %v786, 1.0
        %v821 = vadd.f32 %v788, 1.0
        %v822 = vadd.f32 %v790, 1.0
        %v823 = vrcp.pop %v791
        %v824 = vmul.f32 1.0, %v823
        %v825 = vrcp.pop %v792
        %v826 = vmul.f32 1.0, %v825
        %v827 = vrcp.pop %v793
        %v828 = vmul.f32 1.0, %v827
        %v829 = vrcp.pop %v794
        %v830 = vmul.f32 1.0, %v829
        %v831 = vrcp.pop %v795
        %v832 = vmul.f32 1.0, %v831
        %v833 = vrcp.pop %v796
        %v834 = vmul.f32 1.0, %v833
        %v835 = vrcp.pop %v797
        %v836 = vmul.f32 1.0, %v835
        %v837 = vrcp.pop %v798
        %v838 = vmul.f32 1.0, %v837
        %v839 = vrcp.pop %v799
        %v840 = vmul.f32 1.0, %v839
        %v841 = vrcp.pop %v800
        %v842 = vmul.f32 1.0, %v841
        %v843 = vrcp.pop %v801
        %v844 = vmul.f32 1.0, %v843
        %v845 = vrcp.pop %v802
        %v846 = vmul.f32 1.0, %v845
        %v847 = vrcp.pop %v803
        %v848 = vmul.f32 1.0, %v847
        %v849 = vrcp.pop %v804
        %v850 = vmul.f32 1.0, %v849
        %v851 = vrcp.pop %v805
        %v852 = vmul.f32 1.0, %v851
        %v853 = vrcp.pop %v806
        %v854 = vmul.f32 1.0, %v853
        %v855 = vrcp.pop %v807
        %v856 = vmul.f32 1.0, %v855
        %v857 = vrcp.pop %v808
        %v858 = vmul.f32 1.0, %v857
        %v859 = vrcp.pop %v809
        %v860 = vmul.f32 1.0, %v859
        %v861 = vrcp.pop %v810
        %v862 = vmul.f32 1.0, %v861
        %v863 = vrcp.pop %v811
        %v864 = vmul.f32 1.0, %v863
        %v865 = vrcp.pop %v812
        %v866 = vmul.f32 1.0, %v865
        %v867 = vrcp.pop %v813
        %v868 = vmul.f32 1.0, %v867
        %v869 = vrcp.pop %v814
        %v870 = vmul.f32 1.0, %v869
        %v871 = vrcp.pop %v815
        %v872 = vmul.f32 1.0, %v871
        %v873 = vrcp.pop %v816
        %v874 = vmul.f32 1.0, %v873
        %v875 = vrcp.pop %v817
        %v876 = vmul.f32 1.0, %v875
        %v877 = vrcp.pop %v818
        %v878 = vmul.f32 1.0, %v877
        %v879 = vrcp.pop %v819
        %v880 = vmul.f32 1.0, %v879
        %v881 = vrcp.pop %v820
        %v882 = vmul.f32 1.0, %v881
        %v883 = vrcp.pop %v821
        %v884 = vmul.f32 1.0, %v883
        %v885 = vrcp.pop %v822
        %v886 = vmul.f32 1.0, %v885
        %v887 = vpack.c.bf16 %v826, %v824
        %v888 = vpack.c.bf16 %v830, %v828
        %v889 = vpack.c.bf16 %v834, %v832
        %v890 = vpack.c.bf16 %v838, %v836
        %v891 = vpack.c.bf16 %v842, %v840
        %v892 = vpack.c.bf16 %v846, %v844
        %v893 = vpack.c.bf16 %v850, %v848
        %v894 = vpack.c.bf16 %v854, %v852
        %v895 = vpack.c.bf16 %v858, %v856
        %v896 = vpack.c.bf16 %v862, %v860
        %v897 = vpack.c.bf16 %v866, %v864
        %v898 = vpack.c.bf16 %v870, %v868
        %v899 = vpack.c.bf16 %v874, %v872
        %v900 = vpack.c.bf16 %v878, %v876
        %v901 = vpack.c.bf16 %v882, %v880
        %v902 = vpack.c.bf16 %v886, %v884
        %v903 = vld [vmem:[#allocation7] sm:$0xf]
        %v904 = vld [vmem:[#allocation7 + $0x4] sm:$0xf]
        %v905 = vld [vmem:[#allocation7 + $0x8] sm:$0xf]
        %v906 = vld [vmem:[#allocation7 + $0xc] sm:$0xf]
        %v907 = vld [vmem:[#allocation7 + $0x10] sm:$0xf]
        %v908 = vld [vmem:[#allocation7 + $0x14] sm:$0xf]
        %v909 = vld [vmem:[#allocation7 + $0x18] sm:$0xf]
        %v910 = vld [vmem:[#allocation7 + $0x1c] sm:$0xf]
        %v911 = vld [vmem:[#allocation7 + $0x20] sm:$0xf]
        %v912 = vld [vmem:[#allocation7 + $0x24] sm:$0xf]
        %v913 = vld [vmem:[#allocation7 + $0x28] sm:$0xf]
        %v914 = vld [vmem:[#allocation7 + $0x2c] sm:$0xf]
        %v915 = vld [vmem:[#allocation7 + $0x30] sm:$0xf]
        %v916 = vld [vmem:[#allocation7 + $0x34] sm:$0xf]
        %v917 = vld [vmem:[#allocation7 + $0x38] sm:$0xf]
        %v918 = vld [vmem:[#allocation7 + $0x3c] sm:$0xf]
        %v920 = vlaneseq
        %v921 = vshrl.u32 %v920, 7
        %v922 = vsub.s32 0, %v921
        %v923 = vrot.slane %v461, %v922
        %v941 = vunpack.c.l.b16 %v903
        %v942 = vunpack.c.l.b16 %v904
        %v943 = vunpack.c.l.b16 %v905
        %v944 = vunpack.c.l.b16 %v906
        %v945 = vunpack.c.l.b16 %v907
        %v946 = vunpack.c.l.b16 %v908
        %v947 = vunpack.c.l.b16 %v909
        %v948 = vunpack.c.l.b16 %v910
        %v949 = vunpack.c.l.b16 %v911
        %v950 = vunpack.c.l.b16 %v912
        %v951 = vunpack.c.l.b16 %v913
        %v952 = vunpack.c.l.b16 %v914
        %v953 = vunpack.c.l.b16 %v915
        %v954 = vunpack.c.l.b16 %v916
        %v955 = vunpack.c.l.b16 %v917
        %v956 = vunpack.c.l.b16 %v918
        %v957 = vpack.c.b16 %v942, %v941
        %v958 = vpack.c.b16 %v944, %v943
        %v959 = vpack.c.b16 %v946, %v945
        %v960 = vpack.c.b16 %v948, %v947
        %v961 = vpack.c.b16 %v950, %v949
        %v962 = vpack.c.b16 %v952, %v951
        %v963 = vpack.c.b16 %v954, %v953
        %v964 = vpack.c.b16 %v956, %v955
        %973 = vmatprep.subr.bf16.mxu0 0
        %974 = vmatpush1.bf16.msra.mxu0 %v957
        %975 = vmatprep.subr.bf16.mxu0 0
        %976 = vmatpush1.bf16.msra.mxu0 %v958
        %977 = vmatprep.subr.bf16.mxu0 0
        %978 = vmatpush1.bf16.msra.mxu0 %v959
        %979 = vmatprep.subr.bf16.mxu0 0
        %980 = vmatpush1.bf16.msra.mxu0 %v960
        %981 = vmatprep.subr.bf16.mxu0 0
        %982 = vmatpush1.bf16.msra.mxu0 %v961
        %983 = vmatprep.subr.bf16.mxu0 0
        %984 = vmatpush1.bf16.msra.mxu0 %v962
        %985 = vmatprep.subr.bf16.mxu0 0
        %986 = vmatpush1.bf16.msra.mxu0 %v963
        %987 = vmatprep.subr.bf16.mxu0 0
        %988 = vmatpush1.bf16.msra.mxu0 %v964
        %989 = vmatprep.subr.bf16.mxu0 0
        %990 = vmatpush1.bf16.msra.mxu0 0
        %991 = vmatprep.subr.bf16.mxu0 0
        %992 = vmatpush1.bf16.msra.mxu0 0
        %993 = vmatprep.subr.bf16.mxu0 0
        %994 = vmatpush1.bf16.msra.mxu0 0
        %995 = vmatprep.subr.bf16.mxu0 0
        %996 = vmatpush1.bf16.msra.mxu0 0
        %997 = vmatprep.subr.bf16.mxu0 0
        %998 = vmatpush1.bf16.msra.mxu0 0
        %999 = vmatprep.subr.bf16.mxu0 0
        %1000 = vmatpush1.bf16.msra.mxu0 0
        %1001 = vmatprep.subr.bf16.mxu0 0
        %1002 = vmatpush1.bf16.msra.mxu0 0
        %1003 = vmatprep.subr.bf16.mxu0 0
        %1004 = vmatpush1.bf16.msra.mxu0 0
        %1005 = vmatprep.mubr.bf16.mxu0 0
        %1006 = vmatmul.mubr.bf16.gmra.mrb[0].mxu0 %v887
        %v1007 = vpop.f32.mrb[0].mxu0
        %v1008 = vadd.f32 %v923, %v1007
        %v1009 = vpop.f32.mrb[0].mxu0
        %v1010 = vpop.f32.mrb[0].mxu0
        %v1011 = vadd.f32 %v923, %v1010
        %v1012 = vpop.f32.mrb[0].mxu0
        %1013 = vmatprep.mubr.bf16.mxu0 0
        %1014 = vmatmul.mubr.bf16.gmra.mrb[0].mxu0 %v888
        %v1015 = vpop.f32.mrb[0].mxu0
        %v1016 = vadd.f32 %v923, %v1015
        %v1017 = vpop.f32.mrb[0].mxu0
        %v1018 = vpop.f32.mrb[0].mxu0
        %v1019 = vadd.f32 %v923, %v1018
        %v1020 = vpop.f32.mrb[0].mxu0
        %1021 = vmatprep.mubr.bf16.mxu0 0
        %1022 = vmatmul.mubr.bf16.gmra.mrb[0].mxu0 %v889
        %v1023 = vpop.f32.mrb[0].mxu0
        %v1024 = vadd.f32 %v923, %v1023
        %v1025 = vpop.f32.mrb[0].mxu0
        %v1026 = vpop.f32.mrb[0].mxu0
        %v1027 = vadd.f32 %v923, %v1026
        %v1028 = vpop.f32.mrb[0].mxu0
        %1029 = vmatprep.mubr.bf16.mxu0 0
        %1030 = vmatmul.mubr.bf16.gmra.mrb[0].mxu0 %v890
        %v1031 = vpop.f32.mrb[0].mxu0
        %v1032 = vadd.f32 %v923, %v1031
        %v1033 = vpop.f32.mrb[0].mxu0
        %v1034 = vpop.f32.mrb[0].mxu0
        %v1035 = vadd.f32 %v923, %v1034
        %v1036 = vpop.f32.mrb[0].mxu0
        %1037 = vmatprep.mubr.bf16.mxu0 0
        %1038 = vmatmul.mubr.bf16.gmra.mrb[0].mxu0 %v891
        %v1039 = vpop.f32.mrb[0].mxu0
        %v1040 = vadd.f32 %v923, %v1039
        %v1041 = vpop.f32.mrb[0].mxu0
        %v1042 = vpop.f32.mrb[0].mxu0
        %v1043 = vadd.f32 %v923, %v1042
        %v1044 = vpop.f32.mrb[0].mxu0
        %1045 = vmatprep.mubr.bf16.mxu0 0
        %1046 = vmatmul.mubr.bf16.gmra.mrb[0].mxu0 %v892
        %v1047 = vpop.f32.mrb[0].mxu0
        %v1048 = vadd.f32 %v923, %v1047
        %v1049 = vpop.f32.mrb[0].mxu0
        %v1050 = vpop.f32.mrb[0].mxu0
        %v1051 = vadd.f32 %v923, %v1050
        %v1052 = vpop.f32.mrb[0].mxu0
        %1053 = vmatprep.mubr.bf16.mxu0 0
        %1054 = vmatmul.mubr.bf16.gmra.mrb[0].mxu0 %v893
        %v1055 = vpop.f32.mrb[0].mxu0
        %v1056 = vadd.f32 %v923, %v1055
        %v1057 = vpop.f32.mrb[0].mxu0
        %v1058 = vpop.f32.mrb[0].mxu0
        %v1059 = vadd.f32 %v923, %v1058
        %v1060 = vpop.f32.mrb[0].mxu0
        %1061 = vmatprep.mubr.bf16.mxu0 0
        %1062 = vmatmul.mubr.bf16.gmra.mrb[0].mxu0 %v894
        %v1063 = vpop.f32.mrb[0].mxu0
        %v1064 = vadd.f32 %v923, %v1063
        %v1065 = vpop.f32.mrb[0].mxu0
        %v1066 = vpop.f32.mrb[0].mxu0
        %v1067 = vadd.f32 %v923, %v1066
        %v1068 = vpop.f32.mrb[0].mxu0
        %1069 = vmatprep.mubr.bf16.mxu0 0
        %1070 = vmatmul.mubr.bf16.gmra.mrb[0].mxu0 %v895
        %v1071 = vpop.f32.mrb[0].mxu0
        %v1072 = vadd.f32 %v923, %v1071
        %v1073 = vpop.f32.mrb[0].mxu0
        %v1074 = vpop.f32.mrb[0].mxu0
        %v1075 = vadd.f32 %v923, %v1074
        %v1076 = vpop.f32.mrb[0].mxu0
        %1077 = vmatprep.mubr.bf16.mxu0 0
        %1078 = vmatmul.mubr.bf16.gmra.mrb[0].mxu0 %v896
        %v1079 = vpop.f32.mrb[0].mxu0
        %v1080 = vadd.f32 %v923, %v1079
        %v1081 = vpop.f32.mrb[0].mxu0
        %v1082 = vpop.f32.mrb[0].mxu0
        %v1083 = vadd.f32 %v923, %v1082
        %v1084 = vpop.f32.mrb[0].mxu0
        %1085 = vmatprep.mubr.bf16.mxu0 0
        %1086 = vmatmul.mubr.bf16.gmra.mrb[0].mxu0 %v897
        %v1087 = vpop.f32.mrb[0].mxu0
        %v1088 = vadd.f32 %v923, %v1087
        %v1089 = vpop.f32.mrb[0].mxu0
        %v1090 = vpop.f32.mrb[0].mxu0
        %v1091 = vadd.f32 %v923, %v1090
        %v1092 = vpop.f32.mrb[0].mxu0
        %1093 = vmatprep.mubr.bf16.mxu0 0
        %1094 = vmatmul.mubr.bf16.gmra.mrb[0].mxu0 %v898
        %v1095 = vpop.f32.mrb[0].mxu0
        %v1096 = vadd.f32 %v923, %v1095
        %v1097 = vpop.f32.mrb[0].mxu0
        %v1098 = vpop.f32.mrb[0].mxu0
        %v1099 = vadd.f32 %v923, %v1098
        %v1100 = vpop.f32.mrb[0].mxu0
        %1101 = vmatprep.mubr.bf16.mxu0 0
        %1102 = vmatmul.mubr.bf16.gmra.mrb[0].mxu0 %v899
        %v1103 = vpop.f32.mrb[0].mxu0
        %v1104 = vadd.f32 %v923, %v1103
        %v1105 = vpop.f32.mrb[0].mxu0
        %v1106 = vpop.f32.mrb[0].mxu0
        %v1107 = vadd.f32 %v923, %v1106
        %v1108 = vpop.f32.mrb[0].mxu0
        %1109 = vmatprep.mubr.bf16.mxu0 0
        %1110 = vmatmul.mubr.bf16.gmra.mrb[0].mxu0 %v900
        %v1111 = vpop.f32.mrb[0].mxu0
        %v1112 = vadd.f32 %v923, %v1111
        %v1113 = vpop.f32.mrb[0].mxu0
        %v1114 = vpop.f32.mrb[0].mxu0
        %v1115 = vadd.f32 %v923, %v1114
        %v1116 = vpop.f32.mrb[0].mxu0
        %1117 = vmatprep.mubr.bf16.mxu0 0
        %1118 = vmatmul.mubr.bf16.gmra.mrb[0].mxu0 %v901
        %v1119 = vpop.f32.mrb[0].mxu0
        %v1120 = vadd.f32 %v923, %v1119
        %v1121 = vpop.f32.mrb[0].mxu0
        %v1122 = vpop.f32.mrb[0].mxu0
        %v1123 = vadd.f32 %v923, %v1122
        %v1124 = vpop.f32.mrb[0].mxu0
        %1125 = vmatprep.mubr.bf16.mxu0 0
        %1126 = vmatmul.mubr.bf16.gmra.mrb[0].mxu0 %v902
        %v1127 = vpop.f32.mrb[0].mxu0
        %v1128 = vadd.f32 %v923, %v1127
        %v1129 = vpop.f32.mrb[0].mxu0
        %v1130 = vpop.f32.mrb[0].mxu0
        %v1131 = vadd.f32 %v923, %v1130
        %v1132 = vpop.f32.mrb[0].mxu0
        %1133 = vdwg.mxu0
        %v1134 = vxor.u32 %v1008, 2147483648
        %v1135 = vxor.u32 %v1011, 2147483648
        %v1136 = vxor.u32 %v1016, 2147483648
        %v1137 = vxor.u32 %v1019, 2147483648
        %v1138 = vxor.u32 %v1024, 2147483648
        %v1139 = vxor.u32 %v1027, 2147483648
        %v1140 = vxor.u32 %v1032, 2147483648
        %v1141 = vxor.u32 %v1035, 2147483648
        %v1142 = vxor.u32 %v1040, 2147483648
        %v1143 = vxor.u32 %v1043, 2147483648
        %v1144 = vxor.u32 %v1048, 2147483648
        %v1145 = vxor.u32 %v1051, 2147483648
        %v1146 = vxor.u32 %v1056, 2147483648
        %v1147 = vxor.u32 %v1059, 2147483648
        %v1148 = vxor.u32 %v1064, 2147483648
        %v1149 = vxor.u32 %v1067, 2147483648
        %v1150 = vxor.u32 %v1072, 2147483648
        %v1151 = vxor.u32 %v1075, 2147483648
        %v1152 = vxor.u32 %v1080, 2147483648
        %v1153 = vxor.u32 %v1083, 2147483648
        %v1154 = vxor.u32 %v1088, 2147483648
        %v1155 = vxor.u32 %v1091, 2147483648
        %v1156 = vxor.u32 %v1096, 2147483648
        %v1157 = vxor.u32 %v1099, 2147483648
        %v1158 = vxor.u32 %v1104, 2147483648
        %v1159 = vxor.u32 %v1107, 2147483648
        %v1160 = vxor.u32 %v1112, 2147483648
        %v1161 = vxor.u32 %v1115, 2147483648
        %v1162 = vxor.u32 %v1120, 2147483648
        %v1163 = vxor.u32 %v1123, 2147483648
        %v1164 = vxor.u32 %v1128, 2147483648
        %v1165 = vxor.u32 %v1131, 2147483648
        %v1166 = vmul.f32 %v1134, 1.442695
        %v1167 = vpow.pop %v1166
        %v1168 = vmul.f32 %v1135, 1.442695
        %v1169 = vpow.pop %v1168
        %v1170 = vmul.f32 %v1136, 1.442695
        %v1171 = vpow.pop %v1170
        %v1172 = vmul.f32 %v1137, 1.442695
        %v1173 = vpow.pop %v1172
        %v1174 = vmul.f32 %v1138, 1.442695
        %v1175 = vpow.pop %v1174
        %v1176 = vmul.f32 %v1139, 1.442695
        %v1177 = vpow.pop %v1176
        %v1178 = vmul.f32 %v1140, 1.442695
        %v1179 = vpow.pop %v1178
        %v1180 = vmul.f32 %v1141, 1.442695
        %v1181 = vpow.pop %v1180
        %v1182 = vmul.f32 %v1142, 1.442695
        %v1183 = vpow.pop %v1182
        %v1184 = vmul.f32 %v1143, 1.442695
        %v1185 = vpow.pop %v1184
        %v1186 = vmul.f32 %v1144, 1.442695
        %v1187 = vpow.pop %v1186
        %v1188 = vmul.f32 %v1145, 1.442695
        %v1189 = vpow.pop %v1188
        %v1190 = vmul.f32 %v1146, 1.442695
        %v1191 = vpow.pop %v1190
        %v1192 = vmul.f32 %v1147, 1.442695
        %v1193 = vpow.pop %v1192
        %v1194 = vmul.f32 %v1148, 1.442695
        %v1195 = vpow.pop %v1194
        %v1196 = vmul.f32 %v1149, 1.442695
        %v1197 = vpow.pop %v1196
        %v1198 = vmul.f32 %v1150, 1.442695
        %v1199 = vpow.pop %v1198
        %v1200 = vmul.f32 %v1151, 1.442695
        %v1201 = vpow.pop %v1200
        %v1202 = vmul.f32 %v1152, 1.442695
        %v1203 = vpow.pop %v1202
        %v1204 = vmul.f32 %v1153, 1.442695
        %v1205 = vpow.pop %v1204
        %v1206 = vmul.f32 %v1154, 1.442695
        %v1207 = vpow.pop %v1206
        %v1208 = vmul.f32 %v1155, 1.442695
        %v1209 = vpow.pop %v1208
        %v1210 = vmul.f32 %v1156, 1.442695
        %v1211 = vpow.pop %v1210
        %v1212 = vmul.f32 %v1157, 1.442695
        %v1213 = vpow.pop %v1212
        %v1214 = vmul.f32 %v1158, 1.442695
        %v1215 = vpow.pop %v1214
        %v1216 = vmul.f32 %v1159, 1.442695
        %v1217 = vpow.pop %v1216
        %v1218 = vmul.f32 %v1160, 1.442695
        %v1219 = vpow.pop %v1218
        %v1220 = vmul.f32 %v1161, 1.442695
        %v1221 = vpow.pop %v1220
        %v1222 = vmul.f32 %v1162, 1.442695
        %v1223 = vpow.pop %v1222
        %v1224 = vmul.f32 %v1163, 1.442695
        %v1225 = vpow.pop %v1224
        %v1226 = vmul.f32 %v1164, 1.442695
        %v1227 = vpow.pop %v1226
        %v1228 = vmul.f32 %v1165, 1.442695
        %v1229 = vpow.pop %v1228
        %v1230 = vadd.f32 %v1167, 1.0
        %v1231 = vadd.f32 %v1169, 1.0
        %v1232 = vadd.f32 %v1171, 1.0
        %v1233 = vadd.f32 %v1173, 1.0
        %v1234 = vadd.f32 %v1175, 1.0
        %v1235 = vadd.f32 %v1177, 1.0
        %v1236 = vadd.f32 %v1179, 1.0
        %v1237 = vadd.f32 %v1181, 1.0
        %v1238 = vadd.f32 %v1183, 1.0
        %v1239 = vadd.f32 %v1185, 1.0
        %v1240 = vadd.f32 %v1187, 1.0
        %v1241 = vadd.f32 %v1189, 1.0
        %v1242 = vadd.f32 %v1191, 1.0
        %v1243 = vadd.f32 %v1193, 1.0
        %v1244 = vadd.f32 %v1195, 1.0
        %v1245 = vadd.f32 %v1197, 1.0
        %v1246 = vadd.f32 %v1199, 1.0
        %v1247 = vadd.f32 %v1201, 1.0
        %v1248 = vadd.f32 %v1203, 1.0
        %v1249 = vadd.f32 %v1205, 1.0
        %v1250 = vadd.f32 %v1207, 1.0
        %v1251 = vadd.f32 %v1209, 1.0
        %v1252 = vadd.f32 %v1211, 1.0
        %v1253 = vadd.f32 %v1213, 1.0
        %v1254 = vadd.f32 %v1215, 1.0
        %v1255 = vadd.f32 %v1217, 1.0
        %v1256 = vadd.f32 %v1219, 1.0
        %v1257 = vadd.f32 %v1221, 1.0
        %v1258 = vadd.f32 %v1223, 1.0
        %v1259 = vadd.f32 %v1225, 1.0
        %v1260 = vadd.f32 %v1227, 1.0
        %v1261 = vadd.f32 %v1229, 1.0
        %v1262 = vrcp.pop %v1230
        %v1263 = vmul.f32 1.0, %v1262
        %v1264 = vrcp.pop %v1231
        %v1265 = vmul.f32 1.0, %v1264
        %v1266 = vrcp.pop %v1232
        %v1267 = vmul.f32 1.0, %v1266
        %v1268 = vrcp.pop %v1233
        %v1269 = vmul.f32 1.0, %v1268
        %v1270 = vrcp.pop %v1234
        %v1271 = vmul.f32 1.0, %v1270
        %v1272 = vrcp.pop %v1235
        %v1273 = vmul.f32 1.0, %v1272
        %v1274 = vrcp.pop %v1236
        %v1275 = vmul.f32 1.0, %v1274
        %v1276 = vrcp.pop %v1237
        %v1277 = vmul.f32 1.0, %v1276
        %v1278 = vrcp.pop %v1238
        %v1279 = vmul.f32 1.0, %v1278
        %v1280 = vrcp.pop %v1239
        %v1281 = vmul.f32 1.0, %v1280
        %v1282 = vrcp.pop %v1240
        %v1283 = vmul.f32 1.0, %v1282
        %v1284 = vrcp.pop %v1241
        %v1285 = vmul.f32 1.0, %v1284
        %v1286 = vrcp.pop %v1242
        %v1287 = vmul.f32 1.0, %v1286
        %v1288 = vrcp.pop %v1243
        %v1289 = vmul.f32 1.0, %v1288
        %v1290 = vrcp.pop %v1244
        %v1291 = vmul.f32 1.0, %v1290
        %v1292 = vrcp.pop %v1245
        %v1293 = vmul.f32 1.0, %v1292
        %v1294 = vrcp.pop %v1246
        %v1295 = vmul.f32 1.0, %v1294
        %v1296 = vrcp.pop %v1247
        %v1297 = vmul.f32 1.0, %v1296
        %v1298 = vrcp.pop %v1248
        %v1299 = vmul.f32 1.0, %v1298
        %v1300 = vrcp.pop %v1249
        %v1301 = vmul.f32 1.0, %v1300
        %v1302 = vrcp.pop %v1250
        %v1303 = vmul.f32 1.0, %v1302
        %v1304 = vrcp.pop %v1251
        %v1305 = vmul.f32 1.0, %v1304
        %v1306 = vrcp.pop %v1252
        %v1307 = vmul.f32 1.0, %v1306
        %v1308 = vrcp.pop %v1253
        %v1309 = vmul.f32 1.0, %v1308
        %v1310 = vrcp.pop %v1254
        %v1311 = vmul.f32 1.0, %v1310
        %v1312 = vrcp.pop %v1255
        %v1313 = vmul.f32 1.0, %v1312
        %v1314 = vrcp.pop %v1256
        %v1315 = vmul.f32 1.0, %v1314
        %v1316 = vrcp.pop %v1257
        %v1317 = vmul.f32 1.0, %v1316
        %v1318 = vrcp.pop %v1258
        %v1319 = vmul.f32 1.0, %v1318
        %v1320 = vrcp.pop %v1259
        %v1321 = vmul.f32 1.0, %v1320
        %v1322 = vrcp.pop %v1260
        %v1323 = vmul.f32 1.0, %v1322
        %v1324 = vrcp.pop %v1261
        %v1325 = vmul.f32 1.0, %v1324
        %v1326 = vpack.c.bf16 %v1265, %v1263
        %v1327 = vpack.c.bf16 %v1269, %v1267
        %v1328 = vpack.c.bf16 %v1273, %v1271
        %v1329 = vpack.c.bf16 %v1277, %v1275
        %v1330 = vpack.c.bf16 %v1281, %v1279
        %v1331 = vpack.c.bf16 %v1285, %v1283
        %v1332 = vpack.c.bf16 %v1289, %v1287
        %v1333 = vpack.c.bf16 %v1293, %v1291
        %v1334 = vpack.c.bf16 %v1297, %v1295
        %v1335 = vpack.c.bf16 %v1301, %v1299
        %v1336 = vpack.c.bf16 %v1305, %v1303
        %v1337 = vpack.c.bf16 %v1309, %v1307
        %v1338 = vpack.c.bf16 %v1313, %v1311
        %v1339 = vpack.c.bf16 %v1317, %v1315
        %v1340 = vpack.c.bf16 %v1321, %v1319
        %v1341 = vpack.c.bf16 %v1325, %v1323
        %v1342 = vld [vmem:[#allocation8] sm:$0xf]
        %v1343 = vld [vmem:[#allocation8 + $0x4] sm:$0xf]
        %v1344 = vld [vmem:[#allocation8 + $0x8] sm:$0xf]
        %v1345 = vld [vmem:[#allocation8 + $0xc] sm:$0xf]
        %v1346 = vld [vmem:[#allocation8 + $0x10] sm:$0xf]
        %v1347 = vld [vmem:[#allocation8 + $0x14] sm:$0xf]
        %v1348 = vld [vmem:[#allocation8 + $0x18] sm:$0xf]
        %v1349 = vld [vmem:[#allocation8 + $0x1c] sm:$0xf]
        %v1350 = vld [vmem:[#allocation8 + $0x20] sm:$0xf]
        %v1351 = vld [vmem:[#allocation8 + $0x24] sm:$0xf]
        %v1352 = vld [vmem:[#allocation8 + $0x28] sm:$0xf]
        %v1353 = vld [vmem:[#allocation8 + $0x2c] sm:$0xf]
        %v1354 = vld [vmem:[#allocation8 + $0x30] sm:$0xf]
        %v1355 = vld [vmem:[#allocation8 + $0x34] sm:$0xf]
        %v1356 = vld [vmem:[#allocation8 + $0x38] sm:$0xf]
        %v1357 = vld [vmem:[#allocation8 + $0x3c] sm:$0xf]
        %v1359 = vlaneseq
        %v1360 = vshrl.u32 %v1359, 7
        %v1361 = vsub.s32 0, %v1360
        %v1362 = vrot.slane %v462, %v1361
        %v1380 = vunpack.c.l.b16 %v1342
        %v1381 = vunpack.c.l.b16 %v1343
        %v1382 = vunpack.c.l.b16 %v1344
        %v1383 = vunpack.c.l.b16 %v1345
        %v1384 = vunpack.c.l.b16 %v1346
        %v1385 = vunpack.c.l.b16 %v1347
        %v1386 = vunpack.c.l.b16 %v1348
        %v1387 = vunpack.c.l.b16 %v1349
        %v1388 = vunpack.c.l.b16 %v1350
        %v1389 = vunpack.c.l.b16 %v1351
        %v1390 = vunpack.c.l.b16 %v1352
        %v1391 = vunpack.c.l.b16 %v1353
        %v1392 = vunpack.c.l.b16 %v1354
        %v1393 = vunpack.c.l.b16 %v1355
        %v1394 = vunpack.c.l.b16 %v1356
        %v1395 = vunpack.c.l.b16 %v1357
        %v1396 = vpack.c.b16 %v1381, %v1380
        %v1397 = vpack.c.b16 %v1383, %v1382
        %v1398 = vpack.c.b16 %v1385, %v1384
        %v1399 = vpack.c.b16 %v1387, %v1386
        %v1400 = vpack.c.b16 %v1389, %v1388
        %v1401 = vpack.c.b16 %v1391, %v1390
        %v1402 = vpack.c.b16 %v1393, %v1392
        %v1403 = vpack.c.b16 %v1395, %v1394
        %1412 = vmatprep.subr.bf16.mxu0 0
        %1413 = vmatpush1.bf16.msra.mxu0 %v1396
        %1414 = vmatprep.subr.bf16.mxu0 0
        %1415 = vmatpush1.bf16.msra.mxu0 %v1397
        %1416 = vmatprep.subr.bf16.mxu0 0
        %1417 = vmatpush1.bf16.msra.mxu0 %v1398
        %1418 = vmatprep.subr.bf16.mxu0 0
        %1419 = vmatpush1.bf16.msra.mxu0 %v1399
        %1420 = vmatprep.subr.bf16.mxu0 0
        %1421 = vmatpush1.bf16.msra.mxu0 %v1400
        %1422 = vmatprep.subr.bf16.mxu0 0
        %1423 = vmatpush1.bf16.msra.mxu0 %v1401
        %1424 = vmatprep.subr.bf16.mxu0 0
        %1425 = vmatpush1.bf16.msra.mxu0 %v1402
        %1426 = vmatprep.subr.bf16.mxu0 0
        %1427 = vmatpush1.bf16.msra.mxu0 %v1403
        %1428 = vmatprep.subr.bf16.mxu0 0
        %1429 = vmatpush1.bf16.msra.mxu0 0
        %1430 = vmatprep.subr.bf16.mxu0 0
        %1431 = vmatpush1.bf16.msra.mxu0 0
        %1432 = vmatprep.subr.bf16.mxu0 0
        %1433 = vmatpush1.bf16.msra.mxu0 0
        %1434 = vmatprep.subr.bf16.mxu0 0
        %1435 = vmatpush1.bf16.msra.mxu0 0
        %1436 = vmatprep.subr.bf16.mxu0 0
        %1437 = vmatpush1.bf16.msra.mxu0 0
        %1438 = vmatprep.subr.bf16.mxu0 0
        %1439 = vmatpush1.bf16.msra.mxu0 0
        %1440 = vmatprep.subr.bf16.mxu0 0
        %1441 = vmatpush1.bf16.msra.mxu0 0
        %1442 = vmatprep.subr.bf16.mxu0 0
        %1443 = vmatpush1.bf16.msra.mxu0 0
        %1444 = vmatprep.mubr.bf16.mxu0 0
        %1445 = vmatmul.mubr.bf16.gmra.mrb[0].mxu0 %v1326
        %v1446 = vpop.f32.mrb[0].mxu0
        %v1447 = vadd.f32 %v1362, %v1446
        %v1448 = vpop.f32.mrb[0].mxu0
        %v1449 = vpop.f32.mrb[0].mxu0
        %v1450 = vadd.f32 %v1362, %v1449
        %v1451 = vpop.f32.mrb[0].mxu0
        %1452 = vmatprep.mubr.bf16.mxu0 0
        %1453 = vmatmul.mubr.bf16.gmra.mrb[0].mxu0 %v1327
        %v1454 = vpop.f32.mrb[0].mxu0
        %v1455 = vadd.f32 %v1362, %v1454
        %v1456 = vpop.f32.mrb[0].mxu0
        %v1457 = vpop.f32.mrb[0].mxu0
        %v1458 = vadd.f32 %v1362, %v1457
        %v1459 = vpop.f32.mrb[0].mxu0
        %1460 = vmatprep.mubr.bf16.mxu0 0
        %1461 = vmatmul.mubr.bf16.gmra.mrb[0].mxu0 %v1328
        %v1462 = vpop.f32.mrb[0].mxu0
        %v1463 = vadd.f32 %v1362, %v1462
        %v1464 = vpop.f32.mrb[0].mxu0
        %v1465 = vpop.f32.mrb[0].mxu0
        %v1466 = vadd.f32 %v1362, %v1465
        %v1467 = vpop.f32.mrb[0].mxu0
        %1468 = vmatprep.mubr.bf16.mxu0 0
        %1469 = vmatmul.mubr.bf16.gmra.mrb[0].mxu0 %v1329
        %v1470 = vpop.f32.mrb[0].mxu0
        %v1471 = vadd.f32 %v1362, %v1470
        %v1472 = vpop.f32.mrb[0].mxu0
        %v1473 = vpop.f32.mrb[0].mxu0
        %v1474 = vadd.f32 %v1362, %v1473
        %v1475 = vpop.f32.mrb[0].mxu0
        %1476 = vmatprep.mubr.bf16.mxu0 0
        %1477 = vmatmul.mubr.bf16.gmra.mrb[0].mxu0 %v1330
        %v1478 = vpop.f32.mrb[0].mxu0
        %v1479 = vadd.f32 %v1362, %v1478
        %v1480 = vpop.f32.mrb[0].mxu0
        %v1481 = vpop.f32.mrb[0].mxu0
        %v1482 = vadd.f32 %v1362, %v1481
        %v1483 = vpop.f32.mrb[0].mxu0
        %1484 = vmatprep.mubr.bf16.mxu0 0
        %1485 = vmatmul.mubr.bf16.gmra.mrb[0].mxu0 %v1331
        %v1486 = vpop.f32.mrb[0].mxu0
        %v1487 = vadd.f32 %v1362, %v1486
        %v1488 = vpop.f32.mrb[0].mxu0
        %v1489 = vpop.f32.mrb[0].mxu0
        %v1490 = vadd.f32 %v1362, %v1489
        %v1491 = vpop.f32.mrb[0].mxu0
        %1492 = vmatprep.mubr.bf16.mxu0 0
        %1493 = vmatmul.mubr.bf16.gmra.mrb[0].mxu0 %v1332
        %v1494 = vpop.f32.mrb[0].mxu0
        %v1495 = vadd.f32 %v1362, %v1494
        %v1496 = vpop.f32.mrb[0].mxu0
        %v1497 = vpop.f32.mrb[0].mxu0
        %v1498 = vadd.f32 %v1362, %v1497
        %v1499 = vpop.f32.mrb[0].mxu0
        %1500 = vmatprep.mubr.bf16.mxu0 0
        %1501 = vmatmul.mubr.bf16.gmra.mrb[0].mxu0 %v1333
        %v1502 = vpop.f32.mrb[0].mxu0
        %v1503 = vadd.f32 %v1362, %v1502
        %v1504 = vpop.f32.mrb[0].mxu0
        %v1505 = vpop.f32.mrb[0].mxu0
        %v1506 = vadd.f32 %v1362, %v1505
        %v1507 = vpop.f32.mrb[0].mxu0
        %1508 = vmatprep.mubr.bf16.mxu0 0
        %1509 = vmatmul.mubr.bf16.gmra.mrb[0].mxu0 %v1334
        %v1510 = vpop.f32.mrb[0].mxu0
        %v1511 = vadd.f32 %v1362, %v1510
        %v1512 = vpop.f32.mrb[0].mxu0
        %v1513 = vpop.f32.mrb[0].mxu0
        %v1514 = vadd.f32 %v1362, %v1513
        %v1515 = vpop.f32.mrb[0].mxu0
        %1516 = vmatprep.mubr.bf16.mxu0 0
        %1517 = vmatmul.mubr.bf16.gmra.mrb[0].mxu0 %v1335
        %v1518 = vpop.f32.mrb[0].mxu0
        %v1519 = vadd.f32 %v1362, %v1518
        %v1520 = vpop.f32.mrb[0].mxu0
        %v1521 = vpop.f32.mrb[0].mxu0
        %v1522 = vadd.f32 %v1362, %v1521
        %v1523 = vpop.f32.mrb[0].mxu0
        %1524 = vmatprep.mubr.bf16.mxu0 0
        %1525 = vmatmul.mubr.bf16.gmra.mrb[0].mxu0 %v1336
        %v1526 = vpop.f32.mrb[0].mxu0
        %v1527 = vadd.f32 %v1362, %v1526
        %v1528 = vpop.f32.mrb[0].mxu0
        %v1529 = vpop.f32.mrb[0].mxu0
        %v1530 = vadd.f32 %v1362, %v1529
        %v1531 = vpop.f32.mrb[0].mxu0
        %1532 = vmatprep.mubr.bf16.mxu0 0
        %1533 = vmatmul.mubr.bf16.gmra.mrb[0].mxu0 %v1337
        %v1534 = vpop.f32.mrb[0].mxu0
        %v1535 = vadd.f32 %v1362, %v1534
        %v1536 = vpop.f32.mrb[0].mxu0
        %v1537 = vpop.f32.mrb[0].mxu0
        %v1538 = vadd.f32 %v1362, %v1537
        %v1539 = vpop.f32.mrb[0].mxu0
        %1540 = vmatprep.mubr.bf16.mxu0 0
        %1541 = vmatmul.mubr.bf16.gmra.mrb[0].mxu0 %v1338
        %v1542 = vpop.f32.mrb[0].mxu0
        %v1543 = vadd.f32 %v1362, %v1542
        %v1544 = vpop.f32.mrb[0].mxu0
        %v1545 = vpop.f32.mrb[0].mxu0
        %v1546 = vadd.f32 %v1362, %v1545
        %v1547 = vpop.f32.mrb[0].mxu0
        %1548 = vmatprep.mubr.bf16.mxu0 0
        %1549 = vmatmul.mubr.bf16.gmra.mrb[0].mxu0 %v1339
        %v1550 = vpop.f32.mrb[0].mxu0
        %v1551 = vadd.f32 %v1362, %v1550
        %v1552 = vpop.f32.mrb[0].mxu0
        %v1553 = vpop.f32.mrb[0].mxu0
        %v1554 = vadd.f32 %v1362, %v1553
        %v1555 = vpop.f32.mrb[0].mxu0
        %1556 = vmatprep.mubr.bf16.mxu0 0
        %1557 = vmatmul.mubr.bf16.gmra.mrb[0].mxu0 %v1340
        %v1558 = vpop.f32.mrb[0].mxu0
        %v1559 = vadd.f32 %v1362, %v1558
        %v1560 = vpop.f32.mrb[0].mxu0
        %v1561 = vpop.f32.mrb[0].mxu0
        %v1562 = vadd.f32 %v1362, %v1561
        %v1563 = vpop.f32.mrb[0].mxu0
        %1564 = vmatprep.mubr.bf16.mxu0 0
        %1565 = vmatmul.mubr.bf16.gmra.mrb[0].mxu0 %v1341
        %v1566 = vpop.f32.mrb[0].mxu0
        %v1567 = vadd.f32 %v1362, %v1566
        %v1568 = vpop.f32.mrb[0].mxu0
        %v1569 = vpop.f32.mrb[0].mxu0
        %v1570 = vadd.f32 %v1362, %v1569
        %v1571 = vpop.f32.mrb[0].mxu0
        %1572 = vdwg.mxu0
        %v1573 = vxor.u32 %v1447, 2147483648
        %v1574 = vxor.u32 %v1450, 2147483648
        %v1575 = vxor.u32 %v1455, 2147483648
        %v1576 = vxor.u32 %v1458, 2147483648
        %v1577 = vxor.u32 %v1463, 2147483648
        %v1578 = vxor.u32 %v1466, 2147483648
        %v1579 = vxor.u32 %v1471, 2147483648
        %v1580 = vxor.u32 %v1474, 2147483648
        %v1581 = vxor.u32 %v1479, 2147483648
        %v1582 = vxor.u32 %v1482, 2147483648
        %v1583 = vxor.u32 %v1487, 2147483648
        %v1584 = vxor.u32 %v1490, 2147483648
        %v1585 = vxor.u32 %v1495, 2147483648
        %v1586 = vxor.u32 %v1498, 2147483648
        %v1587 = vxor.u32 %v1503, 2147483648
        %v1588 = vxor.u32 %v1506, 2147483648
        %v1589 = vxor.u32 %v1511, 2147483648
        %v1590 = vxor.u32 %v1514, 2147483648
        %v1591 = vxor.u32 %v1519, 2147483648
        %v1592 = vxor.u32 %v1522, 2147483648
        %v1593 = vxor.u32 %v1527, 2147483648
        %v1594 = vxor.u32 %v1530, 2147483648
        %v1595 = vxor.u32 %v1535, 2147483648
        %v1596 = vxor.u32 %v1538, 2147483648
        %v1597 = vxor.u32 %v1543, 2147483648
        %v1598 = vxor.u32 %v1546, 2147483648
        %v1599 = vxor.u32 %v1551, 2147483648
        %v1600 = vxor.u32 %v1554, 2147483648
        %v1601 = vxor.u32 %v1559, 2147483648
        %v1602 = vxor.u32 %v1562, 2147483648
        %v1603 = vxor.u32 %v1567, 2147483648
        %v1604 = vxor.u32 %v1570, 2147483648
        %v1605 = vmul.f32 %v1573, 1.442695
        %v1606 = vpow.pop %v1605
        %v1607 = vmul.f32 %v1574, 1.442695
        %v1608 = vpow.pop %v1607
        %v1609 = vmul.f32 %v1575, 1.442695
        %v1610 = vpow.pop %v1609
        %v1611 = vmul.f32 %v1576, 1.442695
        %v1612 = vpow.pop %v1611
        %v1613 = vmul.f32 %v1577, 1.442695
        %v1614 = vpow.pop %v1613
        %v1615 = vmul.f32 %v1578, 1.442695
        %v1616 = vpow.pop %v1615
        %v1617 = vmul.f32 %v1579, 1.442695
        %v1618 = vpow.pop %v1617
        %v1619 = vmul.f32 %v1580, 1.442695
        %v1620 = vpow.pop %v1619
        %v1621 = vmul.f32 %v1581, 1.442695
        %v1622 = vpow.pop %v1621
        %v1623 = vmul.f32 %v1582, 1.442695
        %v1624 = vpow.pop %v1623
        %v1625 = vmul.f32 %v1583, 1.442695
        %v1626 = vpow.pop %v1625
        %v1627 = vmul.f32 %v1584, 1.442695
        %v1628 = vpow.pop %v1627
        %v1629 = vmul.f32 %v1585, 1.442695
        %v1630 = vpow.pop %v1629
        %v1631 = vmul.f32 %v1586, 1.442695
        %v1632 = vpow.pop %v1631
        %v1633 = vmul.f32 %v1587, 1.442695
        %v1634 = vpow.pop %v1633
        %v1635 = vmul.f32 %v1588, 1.442695
        %v1636 = vpow.pop %v1635
        %v1637 = vmul.f32 %v1589, 1.442695
        %v1638 = vpow.pop %v1637
        %v1639 = vmul.f32 %v1590, 1.442695
        %v1640 = vpow.pop %v1639
        %v1641 = vmul.f32 %v1591, 1.442695
        %v1642 = vpow.pop %v1641
        %v1643 = vmul.f32 %v1592, 1.442695
        %v1644 = vpow.pop %v1643
        %v1645 = vmul.f32 %v1593, 1.442695
        %v1646 = vpow.pop %v1645
        %v1647 = vmul.f32 %v1594, 1.442695
        %v1648 = vpow.pop %v1647
        %v1649 = vmul.f32 %v1595, 1.442695
        %v1650 = vpow.pop %v1649
        %v1651 = vmul.f32 %v1596, 1.442695
        %v1652 = vpow.pop %v1651
        %v1653 = vmul.f32 %v1597, 1.442695
        %v1654 = vpow.pop %v1653
        %v1655 = vmul.f32 %v1598, 1.442695
        %v1656 = vpow.pop %v1655
        %v1657 = vmul.f32 %v1599, 1.442695
        %v1658 = vpow.pop %v1657
        %v1659 = vmul.f32 %v1600, 1.442695
        %v1660 = vpow.pop %v1659
        %v1661 = vmul.f32 %v1601, 1.442695
        %v1662 = vpow.pop %v1661
        %v1663 = vmul.f32 %v1602, 1.442695
        %v1664 = vpow.pop %v1663
        %v1665 = vmul.f32 %v1603, 1.442695
        %v1666 = vpow.pop %v1665
        %v1667 = vmul.f32 %v1604, 1.442695
        %v1668 = vpow.pop %v1667
        %v1669 = vadd.f32 %v1606, 1.0
        %v1670 = vadd.f32 %v1608, 1.0
        %v1671 = vadd.f32 %v1610, 1.0
        %v1672 = vadd.f32 %v1612, 1.0
        %v1673 = vadd.f32 %v1614, 1.0
        %v1674 = vadd.f32 %v1616, 1.0
        %v1675 = vadd.f32 %v1618, 1.0
        %v1676 = vadd.f32 %v1620, 1.0
        %v1677 = vadd.f32 %v1622, 1.0
        %v1678 = vadd.f32 %v1624, 1.0
        %v1679 = vadd.f32 %v1626, 1.0
        %v1680 = vadd.f32 %v1628, 1.0
        %v1681 = vadd.f32 %v1630, 1.0
        %v1682 = vadd.f32 %v1632, 1.0
        %v1683 = vadd.f32 %v1634, 1.0
        %v1684 = vadd.f32 %v1636, 1.0
        %v1685 = vadd.f32 %v1638, 1.0
        %v1686 = vadd.f32 %v1640, 1.0
        %v1687 = vadd.f32 %v1642, 1.0
        %v1688 = vadd.f32 %v1644, 1.0
        %v1689 = vadd.f32 %v1646, 1.0
        %v1690 = vadd.f32 %v1648, 1.0
        %v1691 = vadd.f32 %v1650, 1.0
        %v1692 = vadd.f32 %v1652, 1.0
        %v1693 = vadd.f32 %v1654, 1.0
        %v1694 = vadd.f32 %v1656, 1.0
        %v1695 = vadd.f32 %v1658, 1.0
        %v1696 = vadd.f32 %v1660, 1.0
        %v1697 = vadd.f32 %v1662, 1.0
        %v1698 = vadd.f32 %v1664, 1.0
        %v1699 = vadd.f32 %v1666, 1.0
        %v1700 = vadd.f32 %v1668, 1.0
        %v1701 = vrcp.pop %v1669
        %v1702 = vmul.f32 1.0, %v1701
        %v1703 = vrcp.pop %v1670
        %v1704 = vmul.f32 1.0, %v1703
        %v1705 = vrcp.pop %v1671
        %v1706 = vmul.f32 1.0, %v1705
        %v1707 = vrcp.pop %v1672
        %v1708 = vmul.f32 1.0, %v1707
        %v1709 = vrcp.pop %v1673
        %v1710 = vmul.f32 1.0, %v1709
        %v1711 = vrcp.pop %v1674
        %v1712 = vmul.f32 1.0, %v1711
        %v1713 = vrcp.pop %v1675
        %v1714 = vmul.f32 1.0, %v1713
        %v1715 = vrcp.pop %v1676
        %v1716 = vmul.f32 1.0, %v1715
        %v1717 = vrcp.pop %v1677
        %v1718 = vmul.f32 1.0, %v1717
        %v1719 = vrcp.pop %v1678
        %v1720 = vmul.f32 1.0, %v1719
        %v1721 = vrcp.pop %v1679
        %v1722 = vmul.f32 1.0, %v1721
        %v1723 = vrcp.pop %v1680
        %v1724 = vmul.f32 1.0, %v1723
        %v1725 = vrcp.pop %v1681
        %v1726 = vmul.f32 1.0, %v1725
        %v1727 = vrcp.pop %v1682
        %v1728 = vmul.f32 1.0, %v1727
        %v1729 = vrcp.pop %v1683
        %v1730 = vmul.f32 1.0, %v1729
        %v1731 = vrcp.pop %v1684
        %v1732 = vmul.f32 1.0, %v1731
        %v1733 = vrcp.pop %v1685
        %v1734 = vmul.f32 1.0, %v1733
        %v1735 = vrcp.pop %v1686
        %v1736 = vmul.f32 1.0, %v1735
        %v1737 = vrcp.pop %v1687
        %v1738 = vmul.f32 1.0, %v1737
        %v1739 = vrcp.pop %v1688
        %v1740 = vmul.f32 1.0, %v1739
        %v1741 = vrcp.pop %v1689
        %v1742 = vmul.f32 1.0, %v1741
        %v1743 = vrcp.pop %v1690
        %v1744 = vmul.f32 1.0, %v1743
        %v1745 = vrcp.pop %v1691
        %v1746 = vmul.f32 1.0, %v1745
        %v1747 = vrcp.pop %v1692
        %v1748 = vmul.f32 1.0, %v1747
        %v1749 = vrcp.pop %v1693
        %v1750 = vmul.f32 1.0, %v1749
        %v1751 = vrcp.pop %v1694
        %v1752 = vmul.f32 1.0, %v1751
        %v1753 = vrcp.pop %v1695
        %v1754 = vmul.f32 1.0, %v1753
        %v1755 = vrcp.pop %v1696
        %v1756 = vmul.f32 1.0, %v1755
        %v1757 = vrcp.pop %v1697
        %v1758 = vmul.f32 1.0, %v1757
        %v1759 = vrcp.pop %v1698
        %v1760 = vmul.f32 1.0, %v1759
        %v1761 = vrcp.pop %v1699
        %v1762 = vmul.f32 1.0, %v1761
        %v1763 = vrcp.pop %v1700
        %v1764 = vmul.f32 1.0, %v1763
        %v1765 = vpack.c.bf16 %v1704, %v1702
        %v1766 = vpack.c.bf16 %v1708, %v1706
        %v1767 = vpack.c.bf16 %v1712, %v1710
        %v1768 = vpack.c.bf16 %v1716, %v1714
        %v1769 = vpack.c.bf16 %v1720, %v1718
        %v1770 = vpack.c.bf16 %v1724, %v1722
        %v1771 = vpack.c.bf16 %v1728, %v1726
        %v1772 = vpack.c.bf16 %v1732, %v1730
        %v1773 = vpack.c.bf16 %v1736, %v1734
        %v1774 = vpack.c.bf16 %v1740, %v1738
        %v1775 = vpack.c.bf16 %v1744, %v1742
        %v1776 = vpack.c.bf16 %v1748, %v1746
        %v1777 = vpack.c.bf16 %v1752, %v1750
        %v1778 = vpack.c.bf16 %v1756, %v1754
        %v1779 = vpack.c.bf16 %v1760, %v1758
        %v1780 = vpack.c.bf16 %v1764, %v1762
        %v1781 = vld [vmem:[#allocation10] sm:$0xf]
        %v1782 = vld [vmem:[#allocation10 + $0x4] sm:$0xf]
        %v1783 = vld [vmem:[#allocation10 + $0x8] sm:$0xf]
        %v1784 = vld [vmem:[#allocation10 + $0xc] sm:$0xf]
        %v1785 = vld [vmem:[#allocation10 + $0x10] sm:$0xf]
        %v1786 = vld [vmem:[#allocation10 + $0x14] sm:$0xf]
        %v1787 = vld [vmem:[#allocation10 + $0x18] sm:$0xf]
        %v1788 = vld [vmem:[#allocation10 + $0x1c] sm:$0xf]
        %v1789 = vld [vmem:[#allocation10 + $0x20] sm:$0xf]
        %v1790 = vld [vmem:[#allocation10 + $0x24] sm:$0xf]
        %v1791 = vld [vmem:[#allocation10 + $0x28] sm:$0xf]
        %v1792 = vld [vmem:[#allocation10 + $0x2c] sm:$0xf]
        %v1793 = vld [vmem:[#allocation10 + $0x30] sm:$0xf]
        %v1794 = vld [vmem:[#allocation10 + $0x34] sm:$0xf]
        %v1795 = vld [vmem:[#allocation10 + $0x38] sm:$0xf]
        %v1796 = vld [vmem:[#allocation10 + $0x3c] sm:$0xf]
        %v1798 = vlaneseq
        %v1799 = vshrl.u32 %v1798, 7
        %v1800 = vsub.s32 0, %v1799
        %v1801 = vrot.slane %v463, %v1800
        %v1819 = vunpack.c.l.b16 %v1781
        %v1820 = vunpack.c.l.b16 %v1782
        %v1821 = vunpack.c.l.b16 %v1783
        %v1822 = vunpack.c.l.b16 %v1784
        %v1823 = vunpack.c.l.b16 %v1785
        %v1824 = vunpack.c.l.b16 %v1786
        %v1825 = vunpack.c.l.b16 %v1787
        %v1826 = vunpack.c.l.b16 %v1788
        %v1827 = vunpack.c.l.b16 %v1789
        %v1828 = vunpack.c.l.b16 %v1790
        %v1829 = vunpack.c.l.b16 %v1791
        %v1830 = vunpack.c.l.b16 %v1792
        %v1831 = vunpack.c.l.b16 %v1793
        %v1832 = vunpack.c.l.b16 %v1794
        %v1833 = vunpack.c.l.b16 %v1795
        %v1834 = vunpack.c.l.b16 %v1796
        %v1835 = vpack.c.b16 %v1820, %v1819
        %v1836 = vpack.c.b16 %v1822, %v1821
        %v1837 = vpack.c.b16 %v1824, %v1823
        %v1838 = vpack.c.b16 %v1826, %v1825
        %v1839 = vpack.c.b16 %v1828, %v1827
        %v1840 = vpack.c.b16 %v1830, %v1829
        %v1841 = vpack.c.b16 %v1832, %v1831
        %v1842 = vpack.c.b16 %v1834, %v1833
        %1851 = vmatprep.subr.bf16.mxu0 0
        %1852 = vmatpush1.bf16.msra.mxu0 %v1835
        %1853 = vmatprep.subr.bf16.mxu0 0
        %1854 = vmatpush1.bf16.msra.mxu0 %v1836
        %1855 = vmatprep.subr.bf16.mxu0 0
        %1856 = vmatpush1.bf16.msra.mxu0 %v1837
        %1857 = vmatprep.subr.bf16.mxu0 0
        %1858 = vmatpush1.bf16.msra.mxu0 %v1838
        %1859 = vmatprep.subr.bf16.mxu0 0
        %1860 = vmatpush1.bf16.msra.mxu0 %v1839
        %1861 = vmatprep.subr.bf16.mxu0 0
        %1862 = vmatpush1.bf16.msra.mxu0 %v1840
        %1863 = vmatprep.subr.bf16.mxu0 0
        %1864 = vmatpush1.bf16.msra.mxu0 %v1841
        %1865 = vmatprep.subr.bf16.mxu0 0
        %1866 = vmatpush1.bf16.msra.mxu0 %v1842
        %1867 = vmatprep.subr.bf16.mxu0 0
        %1868 = vmatpush1.bf16.msra.mxu0 0
        %1869 = vmatprep.subr.bf16.mxu0 0
        %1870 = vmatpush1.bf16.msra.mxu0 0
        %1871 = vmatprep.subr.bf16.mxu0 0
        %1872 = vmatpush1.bf16.msra.mxu0 0
        %1873 = vmatprep.subr.bf16.mxu0 0
        %1874 = vmatpush1.bf16.msra.mxu0 0
        %1875 = vmatprep.subr.bf16.mxu0 0
        %1876 = vmatpush1.bf16.msra.mxu0 0
        %1877 = vmatprep.subr.bf16.mxu0 0
        %1878 = vmatpush1.bf16.msra.mxu0 0
        %1879 = vmatprep.subr.bf16.mxu0 0
        %1880 = vmatpush1.bf16.msra.mxu0 0
        %1881 = vmatprep.subr.bf16.mxu0 0
        %1882 = vmatpush1.bf16.msra.mxu0 0
        %1883 = vmatprep.mubr.bf16.mxu0 0
        %1884 = vmatmul.mubr.bf16.gmra.mrb[0].mxu0 %v1765
        %v1885 = vpop.f32.mrb[0].mxu0
        %v1886 = vadd.f32 %v1801, %v1885
        %v1887 = vpop.f32.mrb[0].mxu0
        %v1888 = vpop.f32.mrb[0].mxu0
        %v1889 = vadd.f32 %v1801, %v1888
        %v1890 = vpop.f32.mrb[0].mxu0
        %1891 = vmatprep.mubr.bf16.mxu0 0
        %1892 = vmatmul.mubr.bf16.gmra.mrb[0].mxu0 %v1766
        %v1893 = vpop.f32.mrb[0].mxu0
        %v1894 = vadd.f32 %v1801, %v1893
        %v1895 = vpop.f32.mrb[0].mxu0
        %v1896 = vpop.f32.mrb[0].mxu0
        %v1897 = vadd.f32 %v1801, %v1896
        %v1898 = vpop.f32.mrb[0].mxu0
        %1899 = vmatprep.mubr.bf16.mxu0 0
        %1900 = vmatmul.mubr.bf16.gmra.mrb[0].mxu0 %v1767
        %v1901 = vpop.f32.mrb[0].mxu0
        %v1902 = vadd.f32 %v1801, %v1901
        %v1903 = vpop.f32.mrb[0].mxu0
        %v1904 = vpop.f32.mrb[0].mxu0
        %v1905 = vadd.f32 %v1801, %v1904
        %v1906 = vpop.f32.mrb[0].mxu0
        %1907 = vmatprep.mubr.bf16.mxu0 0
        %1908 = vmatmul.mubr.bf16.gmra.mrb[0].mxu0 %v1768
        %v1909 = vpop.f32.mrb[0].mxu0
        %v1910 = vadd.f32 %v1801, %v1909
        %v1911 = vpop.f32.mrb[0].mxu0
        %v1912 = vpop.f32.mrb[0].mxu0
        %v1913 = vadd.f32 %v1801, %v1912
        %v1914 = vpop.f32.mrb[0].mxu0
        %1915 = vmatprep.mubr.bf16.mxu0 0
        %1916 = vmatmul.mubr.bf16.gmra.mrb[0].mxu0 %v1769
        %v1917 = vpop.f32.mrb[0].mxu0
        %v1918 = vadd.f32 %v1801, %v1917
        %v1919 = vpop.f32.mrb[0].mxu0
        %v1920 = vpop.f32.mrb[0].mxu0
        %v1921 = vadd.f32 %v1801, %v1920
        %v1922 = vpop.f32.mrb[0].mxu0
        %1923 = vmatprep.mubr.bf16.mxu0 0
        %1924 = vmatmul.mubr.bf16.gmra.mrb[0].mxu0 %v1770
        %v1925 = vpop.f32.mrb[0].mxu0
        %v1926 = vadd.f32 %v1801, %v1925
        %v1927 = vpop.f32.mrb[0].mxu0
        %v1928 = vpop.f32.mrb[0].mxu0
        %v1929 = vadd.f32 %v1801, %v1928
        %v1930 = vpop.f32.mrb[0].mxu0
        %1931 = vmatprep.mubr.bf16.mxu0 0
        %1932 = vmatmul.mubr.bf16.gmra.mrb[0].mxu0 %v1771
        %v1933 = vpop.f32.mrb[0].mxu0
        %v1934 = vadd.f32 %v1801, %v1933
        %v1935 = vpop.f32.mrb[0].mxu0
        %v1936 = vpop.f32.mrb[0].mxu0
        %v1937 = vadd.f32 %v1801, %v1936
        %v1938 = vpop.f32.mrb[0].mxu0
        %1939 = vmatprep.mubr.bf16.mxu0 0
        %1940 = vmatmul.mubr.bf16.gmra.mrb[0].mxu0 %v1772
        %v1941 = vpop.f32.mrb[0].mxu0
        %v1942 = vadd.f32 %v1801, %v1941
        %v1943 = vpop.f32.mrb[0].mxu0
        %v1944 = vpop.f32.mrb[0].mxu0
        %v1945 = vadd.f32 %v1801, %v1944
        %v1946 = vpop.f32.mrb[0].mxu0
        %1947 = vmatprep.mubr.bf16.mxu0 0
        %1948 = vmatmul.mubr.bf16.gmra.mrb[0].mxu0 %v1773
        %v1949 = vpop.f32.mrb[0].mxu0
        %v1950 = vadd.f32 %v1801, %v1949
        %v1951 = vpop.f32.mrb[0].mxu0
        %v1952 = vpop.f32.mrb[0].mxu0
        %v1953 = vadd.f32 %v1801, %v1952
        %v1954 = vpop.f32.mrb[0].mxu0
        %1955 = vmatprep.mubr.bf16.mxu0 0
        %1956 = vmatmul.mubr.bf16.gmra.mrb[0].mxu0 %v1774
        %v1957 = vpop.f32.mrb[0].mxu0
        %v1958 = vadd.f32 %v1801, %v1957
        %v1959 = vpop.f32.mrb[0].mxu0
        %v1960 = vpop.f32.mrb[0].mxu0
        %v1961 = vadd.f32 %v1801, %v1960
        %v1962 = vpop.f32.mrb[0].mxu0
        %1963 = vmatprep.mubr.bf16.mxu0 0
        %1964 = vmatmul.mubr.bf16.gmra.mrb[0].mxu0 %v1775
        %v1965 = vpop.f32.mrb[0].mxu0
        %v1966 = vadd.f32 %v1801, %v1965
        %v1967 = vpop.f32.mrb[0].mxu0
        %v1968 = vpop.f32.mrb[0].mxu0
        %v1969 = vadd.f32 %v1801, %v1968
        %v1970 = vpop.f32.mrb[0].mxu0
        %1971 = vmatprep.mubr.bf16.mxu0 0
        %1972 = vmatmul.mubr.bf16.gmra.mrb[0].mxu0 %v1776
        %v1973 = vpop.f32.mrb[0].mxu0
        %v1974 = vadd.f32 %v1801, %v1973
        %v1975 = vpop.f32.mrb[0].mxu0
        %v1976 = vpop.f32.mrb[0].mxu0
        %v1977 = vadd.f32 %v1801, %v1976
        %v1978 = vpop.f32.mrb[0].mxu0
        %1979 = vmatprep.mubr.bf16.mxu0 0
        %1980 = vmatmul.mubr.bf16.gmra.mrb[0].mxu0 %v1777
        %v1981 = vpop.f32.mrb[0].mxu0
        %v1982 = vadd.f32 %v1801, %v1981
        %v1983 = vpop.f32.mrb[0].mxu0
        %v1984 = vpop.f32.mrb[0].mxu0
        %v1985 = vadd.f32 %v1801, %v1984
        %v1986 = vpop.f32.mrb[0].mxu0
        %1987 = vmatprep.mubr.bf16.mxu0 0
        %1988 = vmatmul.mubr.bf16.gmra.mrb[0].mxu0 %v1778
        %v1989 = vpop.f32.mrb[0].mxu0
        %v1990 = vadd.f32 %v1801, %v1989
        %v1991 = vpop.f32.mrb[0].mxu0
        %v1992 = vpop.f32.mrb[0].mxu0
        %v1993 = vadd.f32 %v1801, %v1992
        %v1994 = vpop.f32.mrb[0].mxu0
        %1995 = vmatprep.mubr.bf16.mxu0 0
        %1996 = vmatmul.mubr.bf16.gmra.mrb[0].mxu0 %v1779
        %v1997 = vpop.f32.mrb[0].mxu0
        %v1998 = vadd.f32 %v1801, %v1997
        %v1999 = vpop.f32.mrb[0].mxu0
        %v2000 = vpop.f32.mrb[0].mxu0
        %v2001 = vadd.f32 %v1801, %v2000
        %v2002 = vpop.f32.mrb[0].mxu0
        %2003 = vmatprep.mubr.bf16.mxu0 0
        %2004 = vmatmul.mubr.bf16.gmra.mrb[0].mxu0 %v1780
        %v2005 = vpop.f32.mrb[0].mxu0
        %v2006 = vadd.f32 %v1801, %v2005
        %v2007 = vpop.f32.mrb[0].mxu0
        %v2008 = vpop.f32.mrb[0].mxu0
        %v2009 = vadd.f32 %v1801, %v2008
        %v2010 = vpop.f32.mrb[0].mxu0
        %2011 = vdwg.mxu0
        %v2012 = vxor.u32 %v1886, 2147483648
        %v2013 = vxor.u32 %v1889, 2147483648
        %v2014 = vxor.u32 %v1894, 2147483648
        %v2015 = vxor.u32 %v1897, 2147483648
        %v2016 = vxor.u32 %v1902, 2147483648
        %v2017 = vxor.u32 %v1905, 2147483648
        %v2018 = vxor.u32 %v1910, 2147483648
        %v2019 = vxor.u32 %v1913, 2147483648
        %v2020 = vxor.u32 %v1918, 2147483648
        %v2021 = vxor.u32 %v1921, 2147483648
        %v2022 = vxor.u32 %v1926, 2147483648
        %v2023 = vxor.u32 %v1929, 2147483648
        %v2024 = vxor.u32 %v1934, 2147483648
        %v2025 = vxor.u32 %v1937, 2147483648
        %v2026 = vxor.u32 %v1942, 2147483648
        %v2027 = vxor.u32 %v1945, 2147483648
        %v2028 = vxor.u32 %v1950, 2147483648
        %v2029 = vxor.u32 %v1953, 2147483648
        %v2030 = vxor.u32 %v1958, 2147483648
        %v2031 = vxor.u32 %v1961, 2147483648
        %v2032 = vxor.u32 %v1966, 2147483648
        %v2033 = vxor.u32 %v1969, 2147483648
        %v2034 = vxor.u32 %v1974, 2147483648
        %v2035 = vxor.u32 %v1977, 2147483648
        %v2036 = vxor.u32 %v1982, 2147483648
        %v2037 = vxor.u32 %v1985, 2147483648
        %v2038 = vxor.u32 %v1990, 2147483648
        %v2039 = vxor.u32 %v1993, 2147483648
        %v2040 = vxor.u32 %v1998, 2147483648
        %v2041 = vxor.u32 %v2001, 2147483648
        %v2042 = vxor.u32 %v2006, 2147483648
        %v2043 = vxor.u32 %v2009, 2147483648
        %v2044 = vmul.f32 %v2012, 1.442695
        %v2045 = vpow.pop %v2044
        %v2046 = vmul.f32 %v2013, 1.442695
        %v2047 = vpow.pop %v2046
        %v2048 = vmul.f32 %v2014, 1.442695
        %v2049 = vpow.pop %v2048
        %v2050 = vmul.f32 %v2015, 1.442695
        %v2051 = vpow.pop %v2050
        %v2052 = vmul.f32 %v2016, 1.442695
        %v2053 = vpow.pop %v2052
        %v2054 = vmul.f32 %v2017, 1.442695
        %v2055 = vpow.pop %v2054
        %v2056 = vmul.f32 %v2018, 1.442695
        %v2057 = vpow.pop %v2056
        %v2058 = vmul.f32 %v2019, 1.442695
        %v2059 = vpow.pop %v2058
        %v2060 = vmul.f32 %v2020, 1.442695
        %v2061 = vpow.pop %v2060
        %v2062 = vmul.f32 %v2021, 1.442695
        %v2063 = vpow.pop %v2062
        %v2064 = vmul.f32 %v2022, 1.442695
        %v2065 = vpow.pop %v2064
        %v2066 = vmul.f32 %v2023, 1.442695
        %v2067 = vpow.pop %v2066
        %v2068 = vmul.f32 %v2024, 1.442695
        %v2069 = vpow.pop %v2068
        %v2070 = vmul.f32 %v2025, 1.442695
        %v2071 = vpow.pop %v2070
        %v2072 = vmul.f32 %v2026, 1.442695
        %v2073 = vpow.pop %v2072
        %v2074 = vmul.f32 %v2027, 1.442695
        %v2075 = vpow.pop %v2074
        %v2076 = vmul.f32 %v2028, 1.442695
        %v2077 = vpow.pop %v2076
        %v2078 = vmul.f32 %v2029, 1.442695
        %v2079 = vpow.pop %v2078
        %v2080 = vmul.f32 %v2030, 1.442695
        %v2081 = vpow.pop %v2080
        %v2082 = vmul.f32 %v2031, 1.442695
        %v2083 = vpow.pop %v2082
        %v2084 = vmul.f32 %v2032, 1.442695
        %v2085 = vpow.pop %v2084
        %v2086 = vmul.f32 %v2033, 1.442695
        %v2087 = vpow.pop %v2086
        %v2088 = vmul.f32 %v2034, 1.442695
        %v2089 = vpow.pop %v2088
        %v2090 = vmul.f32 %v2035, 1.442695
        %v2091 = vpow.pop %v2090
        %v2092 = vmul.f32 %v2036, 1.442695
        %v2093 = vpow.pop %v2092
        %v2094 = vmul.f32 %v2037, 1.442695
        %v2095 = vpow.pop %v2094
        %v2096 = vmul.f32 %v2038, 1.442695
        %v2097 = vpow.pop %v2096
        %v2098 = vmul.f32 %v2039, 1.442695
        %v2099 = vpow.pop %v2098
        %v2100 = vmul.f32 %v2040, 1.442695
        %v2101 = vpow.pop %v2100
        %v2102 = vmul.f32 %v2041, 1.442695
        %v2103 = vpow.pop %v2102
        %v2104 = vmul.f32 %v2042, 1.442695
        %v2105 = vpow.pop %v2104
        %v2106 = vmul.f32 %v2043, 1.442695
        %v2107 = vpow.pop %v2106
        %v2108 = vadd.f32 %v2045, 1.0
        %v2109 = vadd.f32 %v2047, 1.0
        %v2110 = vadd.f32 %v2049, 1.0
        %v2111 = vadd.f32 %v2051, 1.0
        %v2112 = vadd.f32 %v2053, 1.0
        %v2113 = vadd.f32 %v2055, 1.0
        %v2114 = vadd.f32 %v2057, 1.0
        %v2115 = vadd.f32 %v2059, 1.0
        %v2116 = vadd.f32 %v2061, 1.0
        %v2117 = vadd.f32 %v2063, 1.0
        %v2118 = vadd.f32 %v2065, 1.0
        %v2119 = vadd.f32 %v2067, 1.0
        %v2120 = vadd.f32 %v2069, 1.0
        %v2121 = vadd.f32 %v2071, 1.0
        %v2122 = vadd.f32 %v2073, 1.0
        %v2123 = vadd.f32 %v2075, 1.0
        %v2124 = vadd.f32 %v2077, 1.0
        %v2125 = vadd.f32 %v2079, 1.0
        %v2126 = vadd.f32 %v2081, 1.0
        %v2127 = vadd.f32 %v2083, 1.0
        %v2128 = vadd.f32 %v2085, 1.0
        %v2129 = vadd.f32 %v2087, 1.0
        %v2130 = vadd.f32 %v2089, 1.0
        %v2131 = vadd.f32 %v2091, 1.0
        %v2132 = vadd.f32 %v2093, 1.0
        %v2133 = vadd.f32 %v2095, 1.0
        %v2134 = vadd.f32 %v2097, 1.0
        %v2135 = vadd.f32 %v2099, 1.0
        %v2136 = vadd.f32 %v2101, 1.0
        %v2137 = vadd.f32 %v2103, 1.0
        %v2138 = vadd.f32 %v2105, 1.0
        %v2139 = vadd.f32 %v2107, 1.0
        %v2140 = vrcp.pop %v2108
        %v2141 = vmul.f32 1.0, %v2140
        %v2142 = vrcp.pop %v2109
        %v2143 = vmul.f32 1.0, %v2142
        %v2144 = vrcp.pop %v2110
        %v2145 = vmul.f32 1.0, %v2144
        %v2146 = vrcp.pop %v2111
        %v2147 = vmul.f32 1.0, %v2146
        %v2148 = vrcp.pop %v2112
        %v2149 = vmul.f32 1.0, %v2148
        %v2150 = vrcp.pop %v2113
        %v2151 = vmul.f32 1.0, %v2150
        %v2152 = vrcp.pop %v2114
        %v2153 = vmul.f32 1.0, %v2152
        %v2154 = vrcp.pop %v2115
        %v2155 = vmul.f32 1.0, %v2154
        %v2156 = vrcp.pop %v2116
        %v2157 = vmul.f32 1.0, %v2156
        %v2158 = vrcp.pop %v2117
        %v2159 = vmul.f32 1.0, %v2158
        %v2160 = vrcp.pop %v2118
        %v2161 = vmul.f32 1.0, %v2160
        %v2162 = vrcp.pop %v2119
        %v2163 = vmul.f32 1.0, %v2162
        %v2164 = vrcp.pop %v2120
        %v2165 = vmul.f32 1.0, %v2164
        %v2166 = vrcp.pop %v2121
        %v2167 = vmul.f32 1.0, %v2166
        %v2168 = vrcp.pop %v2122
        %v2169 = vmul.f32 1.0, %v2168
        %v2170 = vrcp.pop %v2123
        %v2171 = vmul.f32 1.0, %v2170
        %v2172 = vrcp.pop %v2124
        %v2173 = vmul.f32 1.0, %v2172
        %v2174 = vrcp.pop %v2125
        %v2175 = vmul.f32 1.0, %v2174
        %v2176 = vrcp.pop %v2126
        %v2177 = vmul.f32 1.0, %v2176
        %v2178 = vrcp.pop %v2127
        %v2179 = vmul.f32 1.0, %v2178
        %v2180 = vrcp.pop %v2128
        %v2181 = vmul.f32 1.0, %v2180
        %v2182 = vrcp.pop %v2129
        %v2183 = vmul.f32 1.0, %v2182
        %v2184 = vrcp.pop %v2130
        %v2185 = vmul.f32 1.0, %v2184
        %v2186 = vrcp.pop %v2131
        %v2187 = vmul.f32 1.0, %v2186
        %v2188 = vrcp.pop %v2132
        %v2189 = vmul.f32 1.0, %v2188
        %v2190 = vrcp.pop %v2133
        %v2191 = vmul.f32 1.0, %v2190
        %v2192 = vrcp.pop %v2134
        %v2193 = vmul.f32 1.0, %v2192
        %v2194 = vrcp.pop %v2135
        %v2195 = vmul.f32 1.0, %v2194
        %v2196 = vrcp.pop %v2136
        %v2197 = vmul.f32 1.0, %v2196
        %v2198 = vrcp.pop %v2137
        %v2199 = vmul.f32 1.0, %v2198
        %v2200 = vrcp.pop %v2138
        %v2201 = vmul.f32 1.0, %v2200
        %v2202 = vrcp.pop %v2139
        %v2203 = vmul.f32 1.0, %v2202
        %2204 = vst [vmem:[%s408] sm:$0xff] %v2141
        %2205 = vst [vmem:[%s408 + $0x8] sm:$0xff] %v2143
        %2206 = vst [vmem:[%s408 + $0x10] sm:$0xff] %v2145
        %2207 = vst [vmem:[%s408 + $0x18] sm:$0xff] %v2147
        %2208 = vst [vmem:[%s408 + $0x20] sm:$0xff] %v2149
        %2209 = vst [vmem:[%s408 + $0x28] sm:$0xff] %v2151
        %2210 = vst [vmem:[%s408 + $0x30] sm:$0xff] %v2153
        %2211 = vst [vmem:[%s408 + $0x38] sm:$0xff] %v2155
        %2212 = vst [vmem:[%s408 + $0x40] sm:$0xff] %v2157
        %2213 = vst [vmem:[%s408 + $0x48] sm:$0xff] %v2159
        %2214 = vst [vmem:[%s408 + $0x50] sm:$0xff] %v2161
        %2215 = vst [vmem:[%s408 + $0x58] sm:$0xff] %v2163
        %2216 = vst [vmem:[%s408 + $0x60] sm:$0xff] %v2165
        %2217 = vst [vmem:[%s408 + $0x68] sm:$0xff] %v2167
        %2218 = vst [vmem:[%s408 + $0x70] sm:$0xff] %v2169
        %2219 = vst [vmem:[%s408 + $0x78] sm:$0xff] %v2171
        %2220 = vst [vmem:[%s408 + $0x80] sm:$0xff] %v2173
        %2221 = vst [vmem:[%s408 + $0x88] sm:$0xff] %v2175
        %2222 = vst [vmem:[%s408 + $0x90] sm:$0xff] %v2177
        %2223 = vst [vmem:[%s408 + $0x98] sm:$0xff] %v2179
        %2224 = vst [vmem:[%s408 + $0xa0] sm:$0xff] %v2181
        %2225 = vst [vmem:[%s408 + $0xa8] sm:$0xff] %v2183
        %2226 = vst [vmem:[%s408 + $0xb0] sm:$0xff] %v2185
        %2227 = vst [vmem:[%s408 + $0xb8] sm:$0xff] %v2187
        %2228 = vst [vmem:[%s408 + $0xc0] sm:$0xff] %v2189
        %2229 = vst [vmem:[%s408 + $0xc8] sm:$0xff] %v2191
        %2230 = vst [vmem:[%s408 + $0xd0] sm:$0xff] %v2193
        %2231 = vst [vmem:[%s408 + $0xd8] sm:$0xff] %v2195
        %2232 = vst [vmem:[%s408 + $0xe0] sm:$0xff] %v2197
        %2233 = vst [vmem:[%s408 + $0xe8] sm:$0xff] %v2199
        %2234 = vst [vmem:[%s408 + $0xf0] sm:$0xff] %v2201
        %2235 = vst [vmem:[%s408 + $0xf8] sm:$0xff] %v2203
        %s2236 = sand.u32 %s230, 1
        %s2237 = scalar_lea.sflag [#allocation4], %s2236
        %s2238 = sand.u32 %s230, 1
        %s2239 = smul.addr %s2238, 256
        %s2240 = scalar_lea.vmem [#allocation11], %s2239
        // Predicated region
        $region77: #{tpu_custom_call.1} parent=55 // pred_check
          %p2241 = pneg %p240
        $region78: #{tpu_custom_call.1} parent=55 // pred_check_branch
          %2243 = sbr.rel (%p2241) target = $region80
        $region79: #{tpu_custom_call.1} parent=55 // pred_region
          %s2244 = smul.u32 32, %s28
          %s2246 = ssub.s32 4096, 4096
          %2247 = vsyncadd %s2237, %s2246
          %s2248 = smul.addr %s2244, 128
          %s2249 = scalar_lea.hbm %s9, %s2248
          %s2250 = sshll.u32 %s2240, 4
          %s2251 = int_to_ptr.vmem [resolvable:$true] %s2250
          %2256 = dma.vmem_to_hbm [thread:$0]  %s2251, 4096, %s2249, %s2237, 128, 128, 8
        $region80: #{tpu_custom_call.1} parent=55 // pred_fallthru
          _
      $region56: #{tpu_custom_call.1} parent=5 // pred_fallthru
        _
      %p2257 = scmp.le.s32.totalorder 2, %s23
      // Predicated region
      $region81: #{tpu_custom_call.1} parent=5 // pred_check
        %p2258 = pneg %p2257
      $region82: #{tpu_custom_call.1} parent=5 // pred_check_branch
        %2260 = sbr.rel (%p2258) target = $region84
      $region83: #{tpu_custom_call.1} parent=5 // pred_region
        %s2261 = ssub.s32 %s23, 2
        // Predicated region
        $region85: #{tpu_custom_call.1} parent=83 // pred_check
          %p2262 = pneg %p246
        $region86: #{tpu_custom_call.1} parent=83 // pred_check_branch
          %2264 = sbr.rel (%p2262) target = $region88
        $region87: #{tpu_custom_call.1} parent=83 // pred_region
          %s2265 = sand.u32 %s231, 1
          %s2266 = scalar_lea.sflag [#allocation4], %s2265
          %s2267 = sand.u32 %s231, 1
          %s2268 = smul.addr %s2267, 256
          %s2269 = scalar_lea.vmem [#allocation11], %s2268
          %2270 = dma.done %s2266, 4096
        $region88: #{tpu_custom_call.1} parent=83 // pred_fallthru
          _
      $region84: #{tpu_custom_call.1} parent=5 // pred_fallthru
        _
    $region6: #{tpu_custom_call.1} parent=1 // loop_footer
      %s27 = sadd.s32 1, %s23
    $region7: #{tpu_custom_call.1} parent=1 // loop_footer_branch
      %22 = sbr.rel target = $region3
    $region8: #{tpu_custom_call.1} parent=1 // loop_exit
      _
    %2271 = vsyncpa [#allocation3], 1
    %s2272 = scalar_lea.sflag [#allocation3], 1
    %2273 = vsyncpa %s2272, 1
    %2274 = vsyncpa [#allocation6], 1
    %2275 = vsyncpa [#allocation9], 1
    %2276 = vsyncpa [#allocation4], 1
    %s2277 = scalar_lea.sflag [#allocation4], 1
    %2278 = vsyncpa %s2277, 1

</llo_original>
